<compile_context>
chip_gen: v7x
topology: tpu7x:2x2x1
jax: 0.10.0
libtpu: 0.0.40
codegen_flags: <defaults>
</compile_context>

<pallas_src>
import jax
import jax.numpy as jnp
from jax.experimental import pallas as pl
from jax.experimental.pallas import tpu as pltpu

FEAT = 784          # 28 * 28
FEAT_PAD = 896      # 7 * 128 lane-dense padding of the image dim
H1 = 256
H2 = 64
LATENT = 10
LATENT_PAD = 128    # lane-dense padding of each 10-wide latent head


def vae_kernel(x_ref, eps_ref,
               w1_ref, b1_ref, w2_ref, b2_ref, w3_ref, b3_ref,
               w4_ref, b4_ref, w5_ref, b5_ref, w6_ref, b6_ref,
               xhat_ref, kld_ref):
    bf16 = jnp.bfloat16
    f32 = jnp.float32

    x = x_ref[...]                                                    # (tb, 896) bf16

    # --- encoder: 896 -> 256 -> 64 -> fused (mu|sigma), ReLU after each layer ---
    h = jnp.dot(x, w1_ref[...], preferred_element_type=f32) + b1_ref[...]
    h = jnp.maximum(h, 0.0)
    h = jnp.dot(h.astype(bf16), w2_ref[...], preferred_element_type=f32) + b2_ref[...]
    h = jnp.maximum(h, 0.0)
    ms = jnp.dot(h.astype(bf16), w3_ref[...], preferred_element_type=f32) + b3_ref[...]
    ms = jnp.maximum(ms, 0.0)                                         # (tb, 256) f32
    mu = ms[:, :LATENT_PAD]                                           # vreg-aligned slices
    sigma = ms[:, LATENT_PAD:]

    # --- reparameterize (padded latent lanes of mu/sigma are exactly zero) ---
    z = mu + sigma * eps_ref[...].astype(f32)                         # (tb, 128) f32

    # --- decoder: 128(10) -> 64 -> 256 -> 896(784), ReLU, ReLU, Sigmoid ---
    d = jnp.dot(z.astype(bf16), w4_ref[...], preferred_element_type=f32) + b4_ref[...]
    d = jnp.maximum(d, 0.0)
    d = jnp.dot(d.astype(bf16), w5_ref[...], preferred_element_type=f32) + b5_ref[...]
    d = jnp.maximum(d, 0.0)
    logits = jnp.dot(d.astype(bf16), w6_ref[...], preferred_element_type=f32) + b6_ref[...]
    xhat_ref[...] = jax.nn.sigmoid(logits).astype(xhat_ref.dtype)     # bf16 store

    # --- in-kernel KLD reduction: mask padded latent lanes, sum to (tb, 1) ---
    s2 = sigma * sigma
    kld_elem = mu * mu + s2 - jnp.log(1e-8 + s2) - 1.0
    lane = jax.lax.broadcasted_iota(jnp.int32, kld_elem.shape, 1)
    kld_elem = jnp.where(lane < LATENT, kld_elem, 0.0)
    kld_ref[...] = jnp.sum(kld_elem, axis=-1, keepdims=True)          # (tb, 1) f32


def _linear(key, fan_in, fan_out):
    """PyTorch-style Linear init (uniform +/- 1/sqrt(fan_in))."""
    kw, kb = jax.random.split(key)
    bound = 1.0 / float(fan_in) ** 0.5
    w = jax.random.uniform(kw, (fan_in, fan_out), jnp.float32, minval=-bound, maxval=bound)
    b = jax.random.uniform(kb, (1, fan_out), jnp.float32, minval=-bound, maxval=bound)
    return w, b


def init_params(key):
    """Padded, MXU-ready VAE params: bf16 weights, f32 biases."""
    k1, k2, k3, k4, k5, k6 = jax.random.split(key, 6)

    w1, b1 = _linear(k1, FEAT, H1)            # 784 -> 256
    w2, b2 = _linear(k2, H1, H2)              # 256 -> 64
    w3, b3 = _linear(k3, H2, 2 * LATENT)      # 64 -> 20 (single head, as in reference)
    w4, b4 = _linear(k4, LATENT, H2)          # 10 -> 64
    w5, b5 = _linear(k5, H2, H1)              # 64 -> 256
    w6, b6 = _linear(k6, H1, FEAT)            # 256 -> 784

    # Zero padding keeps the math identical: padded x columns hit zero w1 rows,
    # padded latent lanes stay exactly zero, padded xhat columns are sliced off.
    w1 = jnp.pad(w1, ((0, FEAT_PAD - FEAT), (0, 0)))

    # Fused mu|sigma head: lanes [0:10] = mu columns, [128:138] = sigma columns.
    w3f = jnp.zeros((H2, 2 * LATENT_PAD), jnp.float32)
    w3f = w3f.at[:, :LATENT].set(w3[:, :LATENT])
    w3f = w3f.at[:, LATENT_PAD:LATENT_PAD + LATENT].set(w3[:, LATENT:])
    b3f = jnp.zeros((1, 2 * LATENT_PAD), jnp.float32)
    b3f = b3f.at[:, :LATENT].set(b3[:, :LATENT])
    b3f = b3f.at[:, LATENT_PAD:LATENT_PAD + LATENT].set(b3[:, LATENT:])

    w4 = jnp.pad(w4, ((0, LATENT_PAD - LATENT), (0, 0)))
    w6 = jnp.pad(w6, ((0, 0), (0, FEAT_PAD - FEAT)))
    b6 = jnp.pad(b6, ((0, 0), (0, FEAT_PAD - FEAT)))

    bf = lambda w: w.astype(jnp.bfloat16)
    return [bf(w1), b1, bf(w2), b2, bf(w3f), b3f,
            bf(w4), b4, bf(w5), b5, bf(w6), b6]


def _pick_tiling(B):
    """Return (tb, B_pad): batch tile and padded batch size."""
    if B <= 256:
        return B, B                       # single block == full batch dim (always legal)
    # Prefer >= 4 grid steps: keeps both v7x TensorCores busy and the DMA
    # double-buffer pipeline in steady state.
    for tb in (512, 256):
        if B % tb == 0 and B // tb >= 4:
            return tb, B
    # Otherwise at least 2 steps with a reasonably large tile (v6e amortization).
    for tb in (256, 128):
        if B % tb == 0 and B // tb >= 2:
            return tb, B
    for tb in (512, 256, 128):
        if B % tb == 0:
            return tb, B
    # Awkward large B: pad up to a multiple of 128 and slice outputs outside.
    tb = 128
    return tb, ((B + tb - 1) // tb) * tb


def vae_forward(x_nchw, eps, params):
    B = x_nchw.shape[0]
    tb, b_pad = _pick_tiling(B)
    grid = (b_pad // tb,)

    # bf16 streamed inputs, lane-dense padded (fused with the cast in XLA).
    x_flat = x_nchw.reshape(B, FEAT).astype(jnp.bfloat16)
    x_flat = jnp.pad(x_flat, ((0, b_pad - B), (0, FEAT_PAD - FEAT)))
    eps_pad = jnp.pad(eps.astype(jnp.bfloat16),
                      ((0, b_pad - B), (0, LATENT_PAD - LATENT)))

    # x / eps / outputs streamed per batch tile; all weights VMEM-resident.
    resident = lambda p: pl.BlockSpec(p.shape, lambda i: (0, 0))
    in_specs = ([pl.BlockSpec((tb, FEAT_PAD), lambda i: (i, 0)),
                 pl.BlockSpec((tb, LATENT_PAD), lambda i: (i, 0))]
                + [resident(p) for p in params])
    out_specs = (pl.BlockSpec((tb, FEAT_PAD), lambda i: (i, 0)),
                 pl.BlockSpec((tb, 1), lambda i: (i, 0)))

    flops = 2 * b_pad * (FEAT_PAD * H1 + H1 * H2 + H2 * 2 * LATENT_PAD
                         + LATENT_PAD * H2 + H2 * H1 + H1 * FEAT_PAD)
    param_bytes = sum(int(p.size) * p.dtype.itemsize for p in params)
    bytes_accessed = (param_bytes
                      + b_pad * FEAT_PAD * 2        # x (bf16 in)
                      + b_pad * LATENT_PAD * 2      # eps (bf16 in)
                      + b_pad * FEAT_PAD * 2        # x_hat (bf16 out)
                      + b_pad * 4)                  # kld rows (f32 out)
    cost = pl.CostEstimate(flops=flops,
                           transcendentals=b_pad * (FEAT_PAD + LATENT_PAD),
                           bytes_accessed=int(bytes_accessed))

    xhat_pad, kld_rows = pl.pallas_call(
        vae_kernel,
        out_shape=(jax.ShapeDtypeStruct((b_pad, FEAT_PAD), jnp.bfloat16),
                   jax.ShapeDtypeStruct((b_pad, 1), jnp.float32)),
        grid=grid,
        in_specs=in_specs,
        out_specs=out_specs,
        compiler_params=pltpu.CompilerParams(
            dimension_semantics=("parallel",),
            vmem_limit_bytes=48 << 20),
        cost_estimate=cost,
    )(x_flat, eps_pad, *params)

    x_hat = xhat_pad[:B, :FEAT].astype(jnp.float32).reshape(B, 1, 28, 28)
    kld = 0.5 * jnp.sum(kld_rows[:B, 0]) / (B * 28 * 28)
    return x_hat, kld


if __name__ == "__main__":
    key = jax.random.PRNGKey(0)
    k_param, k_x, k_eps = jax.random.split(key, 3)

    B = 2
    params = init_params(k_param)
    x = jax.random.uniform(k_x, (B, 1, 28, 28), jnp.float32)   # input image batch
    eps = jax.random.normal(k_eps, (B, LATENT), jnp.float32)   # randn_like(sigma)

    x_hat, kld = jax.jit(vae_forward)(x, eps, params)
    jax.block_until_ready((x_hat, kld))

    assert x_hat.shape == (B, 1, 28, 28)
    assert x_hat.dtype == jnp.float32
    assert kld.shape == ()
    assert bool(jnp.isfinite(kld))
    assert bool(jnp.all((x_hat >= 0.0) & (x_hat <= 1.0)))
    print("KERNEL_OK")
</pallas_src>

<mosaic_0001>
module attributes {stable_mosaic.version = 11 : i64} {
  func.func @vae_kernel(%arg0: i32, %arg1: memref<2x896xbf16, #tpu.memory_space<vmem>>, %arg2: memref<2x128xbf16, #tpu.memory_space<vmem>>, %arg3: memref<896x256xbf16, #tpu.memory_space<vmem>>, %arg4: memref<1x256xf32, #tpu.memory_space<vmem>>, %arg5: memref<256x64xbf16, #tpu.memory_space<vmem>>, %arg6: memref<1x64xf32, #tpu.memory_space<vmem>>, %arg7: memref<64x256xbf16, #tpu.memory_space<vmem>>, %arg8: memref<1x256xf32, #tpu.memory_space<vmem>>, %arg9: memref<128x64xbf16, #tpu.memory_space<vmem>>, %arg10: memref<1x64xf32, #tpu.memory_space<vmem>>, %arg11: memref<64x256xbf16, #tpu.memory_space<vmem>>, %arg12: memref<1x256xf32, #tpu.memory_space<vmem>>, %arg13: memref<256x896xbf16, #tpu.memory_space<vmem>>, %arg14: memref<1x896xf32, #tpu.memory_space<vmem>>, %arg15: memref<2x896xbf16, #tpu.memory_space<vmem>>, %arg16: memref<2x1xf32, #tpu.memory_space<vmem>>) attributes {dimension_semantics = [#tpu.dimension_semantics<parallel>], iteration_bounds = array<i64: 1>, scalar_prefetch = 0 : i64, scratch_operands = 0 : i64, tpu.core_type = #tpu.core_type<tc>, window_params = [{transform_indices = @transform_0, window_bounds = array<i64: 2, 896>}, {transform_indices = @transform_1, window_bounds = array<i64: 2, 128>}, {pipeline_mode = #tpu.pipeline_mode<synchronous>, transform_indices = @transform_2, window_bounds = array<i64: 896, 256>}, {pipeline_mode = #tpu.pipeline_mode<synchronous>, transform_indices = @transform_3, window_bounds = array<i64: 1, 256>}, {pipeline_mode = #tpu.pipeline_mode<synchronous>, transform_indices = @transform_4, window_bounds = array<i64: 256, 64>}, {pipeline_mode = #tpu.pipeline_mode<synchronous>, transform_indices = @transform_5, window_bounds = array<i64: 1, 64>}, {pipeline_mode = #tpu.pipeline_mode<synchronous>, transform_indices = @transform_6, window_bounds = array<i64: 64, 256>}, {pipeline_mode = #tpu.pipeline_mode<synchronous>, transform_indices = @transform_7, window_bounds = array<i64: 1, 256>}, {pipeline_mode = #tpu.pipeline_mode<synchronous>, transform_indices = @transform_8, window_bounds = array<i64: 128, 64>}, {pipeline_mode = #tpu.pipeline_mode<synchronous>, transform_indices = @transform_9, window_bounds = array<i64: 1, 64>}, {pipeline_mode = #tpu.pipeline_mode<synchronous>, transform_indices = @transform_10, window_bounds = array<i64: 64, 256>}, {pipeline_mode = #tpu.pipeline_mode<synchronous>, transform_indices = @transform_11, window_bounds = array<i64: 1, 256>}, {pipeline_mode = #tpu.pipeline_mode<synchronous>, transform_indices = @transform_12, window_bounds = array<i64: 256, 896>}, {pipeline_mode = #tpu.pipeline_mode<synchronous>, transform_indices = @transform_13, window_bounds = array<i64: 1, 896>}, {transform_indices = @transform_14, window_bounds = array<i64: 2, 896>}, {transform_indices = @transform_15, window_bounds = array<i64: 2, 1>}]} {
    %c0 = arith.constant 0 : index
    %c0_0 = arith.constant 0 : index
    %0 = vector.load %arg1[%c0, %c0_0] : memref<2x896xbf16, #tpu.memory_space<vmem>>, vector<2x896xbf16>
    %c0_1 = arith.constant 0 : index
    %c0_2 = arith.constant 0 : index
    %1 = vector.load %arg3[%c0_1, %c0_2] : memref<896x256xbf16, #tpu.memory_space<vmem>>, vector<896x256xbf16>
    %cst = arith.constant dense<0.000000e+00> : vector<2x256xf32>
    %2 = tpu.matmul %0, %1, %cst {dimension_numbers = #tpu.dot_dimension_numbers<[1], [0], [0], [1], [0, 0, 1, 1], [], []>} : vector<2x896xbf16>, vector<896x256xbf16>, vector<2x256xf32> -> vector<2x256xf32>
    %c0_3 = arith.constant 0 : index
    %c0_4 = arith.constant 0 : index
    %3 = vector.load %arg4[%c0_3, %c0_4] : memref<1x256xf32, #tpu.memory_space<vmem>>, vector<1x256xf32>
    %4 = vector.broadcast %3 : vector<1x256xf32> to vector<2x256xf32>
    %5 = arith.addf %2, %4 : vector<2x256xf32>
    %cst_5 = arith.constant 0.000000e+00 : f32
    %6 = vector.broadcast %cst_5 : f32 to vector<2x256xf32>
    %7 = arith.maximumf %5, %6 : vector<2x256xf32>
    %8 = arith.truncf %7 : vector<2x256xf32> to vector<2x256xbf16>
    %c0_6 = arith.constant 0 : index
    %c0_7 = arith.constant 0 : index
    %9 = vector.load %arg5[%c0_6, %c0_7] : memref<256x64xbf16, #tpu.memory_space<vmem>>, vector<256x64xbf16>
    %cst_8 = arith.constant dense<0.000000e+00> : vector<2x64xf32>
    %10 = tpu.matmul %8, %9, %cst_8 {dimension_numbers = #tpu.dot_dimension_numbers<[1], [0], [0], [1], [0, 0, 1, 1], [], []>} : vector<2x256xbf16>, vector<256x64xbf16>, vector<2x64xf32> -> vector<2x64xf32>
    %c0_9 = arith.constant 0 : index
    %c0_10 = arith.constant 0 : index
    %11 = vector.load %arg6[%c0_9, %c0_10] : memref<1x64xf32, #tpu.memory_space<vmem>>, vector<1x64xf32>
    %12 = vector.broadcast %11 : vector<1x64xf32> to vector<2x64xf32>
    %13 = arith.addf %10, %12 : vector<2x64xf32>
    %cst_11 = arith.constant 0.000000e+00 : f32
    %14 = vector.broadcast %cst_11 : f32 to vector<2x64xf32>
    %15 = arith.maximumf %13, %14 : vector<2x64xf32>
    %16 = arith.truncf %15 : vector<2x64xf32> to vector<2x64xbf16>
    %c0_12 = arith.constant 0 : index
    %c0_13 = arith.constant 0 : index
    %17 = vector.load %arg7[%c0_12, %c0_13] : memref<64x256xbf16, #tpu.memory_space<vmem>>, vector<64x256xbf16>
    %cst_14 = arith.constant dense<0.000000e+00> : vector<2x256xf32>
    %18 = tpu.matmul %16, %17, %cst_14 {dimension_numbers = #tpu.dot_dimension_numbers<[1], [0], [0], [1], [0, 0, 1, 1], [], []>} : vector<2x64xbf16>, vector<64x256xbf16>, vector<2x256xf32> -> vector<2x256xf32>
    %c0_15 = arith.constant 0 : index
    %c0_16 = arith.constant 0 : index
    %19 = vector.load %arg8[%c0_15, %c0_16] : memref<1x256xf32, #tpu.memory_space<vmem>>, vector<1x256xf32>
    %20 = vector.broadcast %19 : vector<1x256xf32> to vector<2x256xf32>
    %21 = arith.addf %18, %20 : vector<2x256xf32>
    %cst_17 = arith.constant 0.000000e+00 : f32
    %22 = vector.broadcast %cst_17 : f32 to vector<2x256xf32>
    %23 = arith.maximumf %21, %22 : vector<2x256xf32>
    %24 = vector.extract_strided_slice %23 {offsets = [0, 0], sizes = [2, 128], strides = [1, 1]} : vector<2x256xf32> to vector<2x128xf32>
    %25 = vector.extract_strided_slice %23 {offsets = [0, 128], sizes = [2, 128], strides = [1, 1]} : vector<2x256xf32> to vector<2x128xf32>
    %c0_18 = arith.constant 0 : index
    %c0_19 = arith.constant 0 : index
    %26 = vector.load %arg2[%c0_18, %c0_19] : memref<2x128xbf16, #tpu.memory_space<vmem>>, vector<2x128xbf16>
    %27 = arith.extf %26 : vector<2x128xbf16> to vector<2x128xf32>
    %28 = arith.mulf %25, %27 : vector<2x128xf32>
    %29 = arith.addf %24, %28 : vector<2x128xf32>
    %30 = arith.truncf %29 : vector<2x128xf32> to vector<2x128xbf16>
    %c0_20 = arith.constant 0 : index
    %c0_21 = arith.constant 0 : index
    %31 = vector.load %arg9[%c0_20, %c0_21] : memref<128x64xbf16, #tpu.memory_space<vmem>>, vector<128x64xbf16>
    %cst_22 = arith.constant dense<0.000000e+00> : vector<2x64xf32>
    %32 = tpu.matmul %30, %31, %cst_22 {dimension_numbers = #tpu.dot_dimension_numbers<[1], [0], [0], [1], [0, 0, 1, 1], [], []>} : vector<2x128xbf16>, vector<128x64xbf16>, vector<2x64xf32> -> vector<2x64xf32>
    %c0_23 = arith.constant 0 : index
    %c0_24 = arith.constant 0 : index
    %33 = vector.load %arg10[%c0_23, %c0_24] : memref<1x64xf32, #tpu.memory_space<vmem>>, vector<1x64xf32>
    %34 = vector.broadcast %33 : vector<1x64xf32> to vector<2x64xf32>
    %35 = arith.addf %32, %34 : vector<2x64xf32>
    %cst_25 = arith.constant 0.000000e+00 : f32
    %36 = vector.broadcast %cst_25 : f32 to vector<2x64xf32>
    %37 = arith.maximumf %35, %36 : vector<2x64xf32>
    %38 = arith.truncf %37 : vector<2x64xf32> to vector<2x64xbf16>
    %c0_26 = arith.constant 0 : index
    %c0_27 = arith.constant 0 : index
    %39 = vector.load %arg11[%c0_26, %c0_27] : memref<64x256xbf16, #tpu.memory_space<vmem>>, vector<64x256xbf16>
    %cst_28 = arith.constant dense<0.000000e+00> : vector<2x256xf32>
    %40 = tpu.matmul %38, %39, %cst_28 {dimension_numbers = #tpu.dot_dimension_numbers<[1], [0], [0], [1], [0, 0, 1, 1], [], []>} : vector<2x64xbf16>, vector<64x256xbf16>, vector<2x256xf32> -> vector<2x256xf32>
    %c0_29 = arith.constant 0 : index
    %c0_30 = arith.constant 0 : index
    %41 = vector.load %arg12[%c0_29, %c0_30] : memref<1x256xf32, #tpu.memory_space<vmem>>, vector<1x256xf32>
    %42 = vector.broadcast %41 : vector<1x256xf32> to vector<2x256xf32>
    %43 = arith.addf %40, %42 : vector<2x256xf32>
    %cst_31 = arith.constant 0.000000e+00 : f32
    %44 = vector.broadcast %cst_31 : f32 to vector<2x256xf32>
    %45 = arith.maximumf %43, %44 : vector<2x256xf32>
    %46 = arith.truncf %45 : vector<2x256xf32> to vector<2x256xbf16>
    %c0_32 = arith.constant 0 : index
    %c0_33 = arith.constant 0 : index
    %47 = vector.load %arg13[%c0_32, %c0_33] : memref<256x896xbf16, #tpu.memory_space<vmem>>, vector<256x896xbf16>
    %cst_34 = arith.constant dense<0.000000e+00> : vector<2x896xf32>
    %48 = tpu.matmul %46, %47, %cst_34 {dimension_numbers = #tpu.dot_dimension_numbers<[1], [0], [0], [1], [0, 0, 1, 1], [], []>} : vector<2x256xbf16>, vector<256x896xbf16>, vector<2x896xf32> -> vector<2x896xf32>
    %c0_35 = arith.constant 0 : index
    %c0_36 = arith.constant 0 : index
    %49 = vector.load %arg14[%c0_35, %c0_36] : memref<1x896xf32, #tpu.memory_space<vmem>>, vector<1x896xf32>
    %50 = vector.broadcast %49 : vector<1x896xf32> to vector<2x896xf32>
    %51 = arith.addf %48, %50 : vector<2x896xf32>
    %52 = arith.negf %51 : vector<2x896xf32>
    %53 = math.exp %52 : vector<2x896xf32>
    %cst_37 = arith.constant 1.000000e+00 : f32
    %54 = vector.broadcast %cst_37 : f32 to vector<2x896xf32>
    %55 = arith.addf %54, %53 : vector<2x896xf32>
    %56 = arith.divf %54, %55 : vector<2x896xf32>
    %57 = arith.truncf %56 : vector<2x896xf32> to vector<2x896xbf16>
    %c0_38 = arith.constant 0 : index
    %c0_39 = arith.constant 0 : index
    %58 = vector.load %arg15[%c0_38, %c0_39] : memref<2x896xbf16, #tpu.memory_space<vmem>>, vector<2x896xbf16>
    tpu.vector_store %arg15[%c0_38, %c0_39], %57 {strides = array<i32>} : memref<2x896xbf16, #tpu.memory_space<vmem>>, vector<2x896xbf16>,
    %59 = arith.mulf %25, %25 : vector<2x128xf32>
    %60 = arith.mulf %24, %24 : vector<2x128xf32>
    %61 = arith.addf %60, %59 : vector<2x128xf32>
    %cst_40 = arith.constant 9.99999993E-9 : f32
    %62 = vector.broadcast %cst_40 : f32 to vector<2x128xf32>
    %63 = arith.addf %62, %59 : vector<2x128xf32>
    %64 = math.log %63 : vector<2x128xf32>
    %65 = arith.subf %61, %64 : vector<2x128xf32>
    %cst_41 = arith.constant 1.000000e+00 : f32
    %66 = vector.broadcast %cst_41 : f32 to vector<2x128xf32>
    %67 = arith.subf %65, %66 : vector<2x128xf32>
    %68 = tpu.iota {dimensions = array<i32: 1>} : vector<2x128xi32>
    %c10_i32 = arith.constant 10 : i32
    %69 = vector.broadcast %c10_i32 : i32 to vector<2x128xi32>
    %70 = arith.cmpi slt, %68, %69 : vector<2x128xi32>
    %cst_42 = arith.constant 0.000000e+00 : f32
    %71 = vector.broadcast %cst_42 : f32 to vector<2x128xf32>
    %72 = arith.select %70, %67, %71 : vector<2x128xi1>, vector<2x128xf32>
    %cst_43 = arith.constant dense<0.000000e+00> : vector<2xf32>
    %73 = vector.multi_reduction <add>, %72, %cst_43 [1] : vector<2x128xf32> to vector<2xf32>
    %74 = vector.shape_cast %73 : vector<2xf32> to vector<2x1xf32>
    %c0_44 = arith.constant 0 : index
    %c0_45 = arith.constant 0 : index
    %75 = vector.load %arg16[%c0_44, %c0_45] : memref<2x1xf32, #tpu.memory_space<vmem>>, vector<2x1xf32>
    tpu.vector_store %arg16[%c0_44, %c0_45], %74 {strides = array<i32>} : memref<2x1xf32, #tpu.memory_space<vmem>>, vector<2x1xf32>,
    return
  }
  func.func @transform_0(%arg0: i32) -> (i32, i32) {
    %c0_i32 = arith.constant 0 : i32
    %c0_i32_0 = arith.constant 0 : i32
    return %arg0, %c0_i32 : i32, i32
  }
  func.func @transform_1(%arg0: i32) -> (i32, i32) {
    %c0_i32 = arith.constant 0 : i32
    %c0_i32_0 = arith.constant 0 : i32
    return %arg0, %c0_i32 : i32, i32
  }
  func.func @transform_2(%arg0: i32) -> (i32, i32) {
    %c0_i32 = arith.constant 0 : i32
    %c0_i32_0 = arith.constant 0 : i32
    %c0_i32_1 = arith.constant 0 : i32
    return %c0_i32, %c0_i32_0 : i32, i32
  }
  func.func @transform_3(%arg0: i32) -> (i32, i32) {
    %c0_i32 = arith.constant 0 : i32
    %c0_i32_0 = arith.constant 0 : i32
    %c0_i32_1 = arith.constant 0 : i32
    return %c0_i32, %c0_i32_0 : i32, i32
  }
  func.func @transform_4(%arg0: i32) -> (i32, i32) {
    %c0_i32 = arith.constant 0 : i32
    %c0_i32_0 = arith.constant 0 : i32
    %c0_i32_1 = arith.constant 0 : i32
    return %c0_i32, %c0_i32_0 : i32, i32
  }
  func.func @transform_5(%arg0: i32) -> (i32, i32) {
    %c0_i32 = arith.constant 0 : i32
    %c0_i32_0 = arith.constant 0 : i32
    %c0_i32_1 = arith.constant 0 : i32
    return %c0_i32, %c0_i32_0 : i32, i32
  }
  func.func @transform_6(%arg0: i32) -> (i32, i32) {
    %c0_i32 = arith.constant 0 : i32
    %c0_i32_0 = arith.constant 0 : i32
    %c0_i32_1 = arith.constant 0 : i32
    return %c0_i32, %c0_i32_0 : i32, i32
  }
  func.func @transform_7(%arg0: i32) -> (i32, i32) {
    %c0_i32 = arith.constant 0 : i32
    %c0_i32_0 = arith.constant 0 : i32
    %c0_i32_1 = arith.constant 0 : i32
    return %c0_i32, %c0_i32_0 : i32, i32
  }
  func.func @transform_8(%arg0: i32) -> (i32, i32) {
    %c0_i32 = arith.constant 0 : i32
    %c0_i32_0 = arith.constant 0 : i32
    %c0_i32_1 = arith.constant 0 : i32
    return %c0_i32, %c0_i32_0 : i32, i32
  }
  func.func @transform_9(%arg0: i32) -> (i32, i32) {
    %c0_i32 = arith.constant 0 : i32
    %c0_i32_0 = arith.constant 0 : i32
    %c0_i32_1 = arith.constant 0 : i32
    return %c0_i32, %c0_i32_0 : i32, i32
  }
  func.func @transform_10(%arg0: i32) -> (i32, i32) {
    %c0_i32 = arith.constant 0 : i32
    %c0_i32_0 = arith.constant 0 : i32
    %c0_i32_1 = arith.constant 0 : i32
    return %c0_i32, %c0_i32_0 : i32, i32
  }
  func.func @transform_11(%arg0: i32) -> (i32, i32) {
    %c0_i32 = arith.constant 0 : i32
    %c0_i32_0 = arith.constant 0 : i32
    %c0_i32_1 = arith.constant 0 : i32
    return %c0_i32, %c0_i32_0 : i32, i32
  }
  func.func @transform_12(%arg0: i32) -> (i32, i32) {
    %c0_i32 = arith.constant 0 : i32
    %c0_i32_0 = arith.constant 0 : i32
    %c0_i32_1 = arith.constant 0 : i32
    return %c0_i32, %c0_i32_0 : i32, i32
  }
  func.func @transform_13(%arg0: i32) -> (i32, i32) {
    %c0_i32 = arith.constant 0 : i32
    %c0_i32_0 = arith.constant 0 : i32
    %c0_i32_1 = arith.constant 0 : i32
    return %c0_i32, %c0_i32_0 : i32, i32
  }
  func.func @transform_14(%arg0: i32) -> (i32, i32) {
    %c0_i32 = arith.constant 0 : i32
    %c0_i32_0 = arith.constant 0 : i32
    return %arg0, %c0_i32 : i32, i32
  }
  func.func @transform_15(%arg0: i32) -> (i32, i32) {
    %c0_i32 = arith.constant 0 : i32
    %c0_i32_0 = arith.constant 0 : i32
    return %arg0, %c0_i32 : i32, i32
  }
}

</mosaic_0001>

<llo_original>
// kernel: vae_forward.1
$region0: #{vae_forward.1}
  #allocation0 [shape = 'u32[]', space=smem, size = 0x4, offset = 0x4, fixed_abs, tag = 'smem constant byte address 0x4 - core index']
  #allocation1 [shape = 'u32[144,128]{1,0:T(1,128)}', space=vmem, size = 0x12000, scoped, tag = 'internal scratch']
  %s0 = inlined_call_operand.vmem [shape: bf16[2,896], index: 0, kind: input, shape index: {}]
  %s1 = inlined_call_operand.vmem [shape: bf16[2,128], index: 1, kind: input, shape index: {}]
  %s2 = inlined_call_operand.hbm [shape: bf16[896,256], index: 2, kind: input, shape index: {}]
  %s3 = inlined_call_operand.vmem [shape: f32[1,256], index: 3, kind: input, shape index: {}]
  %s4 = inlined_call_operand.vmem [shape: bf16[256,64], index: 4, kind: input, shape index: {}]
  %s5 = inlined_call_operand.vmem [shape: f32[1,64], index: 5, kind: input, shape index: {}]
  %s6 = inlined_call_operand.vmem [shape: bf16[64,256], index: 6, kind: input, shape index: {}]
  %s7 = inlined_call_operand.vmem [shape: f32[1,256], index: 7, kind: input, shape index: {}]
  %s8 = inlined_call_operand.vmem [shape: bf16[128,64], index: 8, kind: input, shape index: {}]
  %s9 = inlined_call_operand.vmem [shape: f32[1,64], index: 9, kind: input, shape index: {}]
  %s10 = inlined_call_operand.vmem [shape: bf16[64,256], index: 10, kind: input, shape index: {}]
  %s11 = inlined_call_operand.vmem [shape: f32[1,256], index: 11, kind: input, shape index: {}]
  %s12 = inlined_call_operand.hbm [shape: bf16[256,896], index: 12, kind: input, shape index: {}]
  %s13 = inlined_call_operand.vmem [shape: f32[1,896], index: 13, kind: input, shape index: {}]
  %s14 = inlined_call_operand.vmem [shape: bf16[2,896], index: 14, kind: output, shape index: {0}]
  %s15 = inlined_call_operand.vmem [shape: f32[2,1], index: 15, kind: output, shape index: {1}]
  %16 = xla_tuple %s14, %s15
  %s17 = sld [smem:[#allocation0]]
  $region82: #{vae_forward.1} parent=0
    _
  %s19 = ssub.s32 1, %s17
  %s20 = scalar_select 0, %s19, %s17
  $region1: #{vae_forward.1} parent=0
    #allocation2 [shape = 'u8[458752]{0}', space=vmem, size = 0x70000, scoped, tag = 'input window, operand 2, single buffered']
    #allocation3 [shape = 's32[1]{0}', space=sflag, size = 0x4, scoped, tag = 'scoped memory for vae_forward.1']
    #allocation4 [shape = 'u8[458752]{0}', space=vmem, size = 0x70000, scoped, tag = 'input window, operand 12, single buffered']
    #allocation5 [shape = 's32[1]{0}', space=sflag, size = 0x4, scoped, tag = 'scoped memory for vae_forward.1']
    %21 = vsyncpa [#allocation3], 0
    %22 = vsyncpa [#allocation5], 0
    // Predicated region
    $region2: #{vae_forward.1} parent=1 // pred_check
      _
    $region3: #{vae_forward.1} parent=1 // pred_check_branch
      %24 = sbr.rel (0) target = $region5
    $region4: #{vae_forward.1} parent=1 // pred_region
      _
    $region5: #{vae_forward.1} parent=1 // pred_fallthru
      _
    // Predicated region
    $region6: #{vae_forward.1} parent=1 // pred_check
      _
    $region7: #{vae_forward.1} parent=1 // pred_check_branch
      %26 = sbr.rel (0) target = $region9
    $region8: #{vae_forward.1} parent=1 // pred_region
      _
    $region9: #{vae_forward.1} parent=1 // pred_fallthru
      _
    // Predicated region
    $region10: #{vae_forward.1} parent=1 // pred_check
      _
    $region11: #{vae_forward.1} parent=1 // pred_check_branch
      %28 = sbr.rel (0) target = $region13
    $region12: #{vae_forward.1} parent=1 // pred_region
      %s30 = ssub.s32 14336, 14336
      %31 = vsyncadd [#allocation3], %s30
      %s32 = sshll.u32 [#allocation2], 4
      %s33 = int_to_ptr.vmem [resolvable:$true] %s32
      %38 = dma.hbm_to_vmem [thread:$0]  %s2, 14336, %s33, [#allocation3], 128, 128, 8
    $region13: #{vae_forward.1} parent=1 // pred_fallthru
      _
    // Predicated region
    $region14: #{vae_forward.1} parent=1 // pred_check
      _
    $region15: #{vae_forward.1} parent=1 // pred_check_branch
      %40 = sbr.rel (0) target = $region17
    $region16: #{vae_forward.1} parent=1 // pred_region
      _
    $region17: #{vae_forward.1} parent=1 // pred_fallthru
      _
    // Predicated region
    $region18: #{vae_forward.1} parent=1 // pred_check
      _
    $region19: #{vae_forward.1} parent=1 // pred_check_branch
      %42 = sbr.rel (0) target = $region21
    $region20: #{vae_forward.1} parent=1 // pred_region
      _
    $region21: #{vae_forward.1} parent=1 // pred_fallthru
      _
    // Predicated region
    $region22: #{vae_forward.1} parent=1 // pred_check
      _
    $region23: #{vae_forward.1} parent=1 // pred_check_branch
      %44 = sbr.rel (0) target = $region25
    $region24: #{vae_forward.1} parent=1 // pred_region
      _
    $region25: #{vae_forward.1} parent=1 // pred_fallthru
      _
    // Predicated region
    $region26: #{vae_forward.1} parent=1 // pred_check
      _
    $region27: #{vae_forward.1} parent=1 // pred_check_branch
      %46 = sbr.rel (0) target = $region29
    $region28: #{vae_forward.1} parent=1 // pred_region
      _
    $region29: #{vae_forward.1} parent=1 // pred_fallthru
      _
    // Predicated region
    $region30: #{vae_forward.1} parent=1 // pred_check
      _
    $region31: #{vae_forward.1} parent=1 // pred_check_branch
      %48 = sbr.rel (0) target = $region33
    $region32: #{vae_forward.1} parent=1 // pred_region
      _
    $region33: #{vae_forward.1} parent=1 // pred_fallthru
      _
    // Predicated region
    $region34: #{vae_forward.1} parent=1 // pred_check
      _
    $region35: #{vae_forward.1} parent=1 // pred_check_branch
      %50 = sbr.rel (0) target = $region37
    $region36: #{vae_forward.1} parent=1 // pred_region
      _
    $region37: #{vae_forward.1} parent=1 // pred_fallthru
      _
    // Predicated region
    $region38: #{vae_forward.1} parent=1 // pred_check
      _
    $region39: #{vae_forward.1} parent=1 // pred_check_branch
      %52 = sbr.rel (0) target = $region41
    $region40: #{vae_forward.1} parent=1 // pred_region
      _
    $region41: #{vae_forward.1} parent=1 // pred_fallthru
      _
    // Predicated region
    $region42: #{vae_forward.1} parent=1 // pred_check
      _
    $region43: #{vae_forward.1} parent=1 // pred_check_branch
      %54 = sbr.rel (0) target = $region45
    $region44: #{vae_forward.1} parent=1 // pred_region
      _
    $region45: #{vae_forward.1} parent=1 // pred_fallthru
      _
    // Predicated region
    $region46: #{vae_forward.1} parent=1 // pred_check
      _
    $region47: #{vae_forward.1} parent=1 // pred_check_branch
      %56 = sbr.rel (0) target = $region49
    $region48: #{vae_forward.1} parent=1 // pred_region
      _
    $region49: #{vae_forward.1} parent=1 // pred_fallthru
      _
    // Predicated region
    $region50: #{vae_forward.1} parent=1 // pred_check
      _
    $region51: #{vae_forward.1} parent=1 // pred_check_branch
      %58 = sbr.rel (0) target = $region53
    $region52: #{vae_forward.1} parent=1 // pred_region
      %s60 = ssub.s32 14336, 14336
      %61 = vsyncadd [#allocation5], %s60
      %s62 = sshll.u32 [#allocation4], 4
      %s63 = int_to_ptr.vmem [resolvable:$true] %s62
      %68 = dma.hbm_to_vmem [thread:$0]  %s12, 14336, %s63, [#allocation5], 448, 448, 28
    $region53: #{vae_forward.1} parent=1 // pred_fallthru
      _
    // Predicated region
    $region54: #{vae_forward.1} parent=1 // pred_check
      _
    $region55: #{vae_forward.1} parent=1 // pred_check_branch
      %70 = sbr.rel (0) target = $region57
    $region56: #{vae_forward.1} parent=1 // pred_region
      _
    $region57: #{vae_forward.1} parent=1 // pred_fallthru
      _
    // Predicated region
    $region58: #{vae_forward.1} parent=1 // pred_check
      _
    $region59: #{vae_forward.1} parent=1 // pred_check_branch
      %72 = sbr.rel (0) target = $region61
    $region60: #{vae_forward.1} parent=1 // pred_region
      %73 = dma.done [#allocation3], 14336
    $region61: #{vae_forward.1} parent=1 // pred_fallthru
      _
    // Predicated region
    $region62: #{vae_forward.1} parent=1 // pred_check
      _
    $region63: #{vae_forward.1} parent=1 // pred_check_branch
      %75 = sbr.rel (0) target = $region65
    $region64: #{vae_forward.1} parent=1 // pred_region
      %76 = dma.done [#allocation5], 14336
    $region65: #{vae_forward.1} parent=1 // pred_fallthru
      _
    %v78 = vld [vmem:[%s0] sm:$0x7f]
    %v79 = vld [vmem:[#allocation2] sm:$0xff]
    %v80 = vld [vmem:[#allocation2 + $0x8] sm:$0xff]
    %v81 = vld [vmem:[#allocation2 + $0x10] sm:$0xff]
    %v82 = vld [vmem:[#allocation2 + $0x18] sm:$0xff]
    %v83 = vld [vmem:[#allocation2 + $0x20] sm:$0xff]
    %v84 = vld [vmem:[#allocation2 + $0x28] sm:$0xff]
    %v85 = vld [vmem:[#allocation2 + $0x30] sm:$0xff]
    %v86 = vld [vmem:[#allocation2 + $0x38] sm:$0xff]
    %v87 = vld [vmem:[#allocation2 + $0x40] sm:$0xff]
    %v88 = vld [vmem:[#allocation2 + $0x48] sm:$0xff]
    %v89 = vld [vmem:[#allocation2 + $0x50] sm:$0xff]
    %v90 = vld [vmem:[#allocation2 + $0x58] sm:$0xff]
    %v91 = vld [vmem:[#allocation2 + $0x60] sm:$0xff]
    %v92 = vld [vmem:[#allocation2 + $0x68] sm:$0xff]
    %v93 = vld [vmem:[#allocation2 + $0x70] sm:$0xff]
    %v94 = vld [vmem:[#allocation2 + $0x78] sm:$0xff]
    %v95 = vld [vmem:[#allocation2 + $0x80] sm:$0xff]
    %v96 = vld [vmem:[#allocation2 + $0x88] sm:$0xff]
    %v97 = vld [vmem:[#allocation2 + $0x90] sm:$0xff]
    %v98 = vld [vmem:[#allocation2 + $0x98] sm:$0xff]
    %v99 = vld [vmem:[#allocation2 + $0xa0] sm:$0xff]
    %v100 = vld [vmem:[#allocation2 + $0xa8] sm:$0xff]
    %v101 = vld [vmem:[#allocation2 + $0xb0] sm:$0xff]
    %v102 = vld [vmem:[#allocation2 + $0xb8] sm:$0xff]
    %v103 = vld [vmem:[#allocation2 + $0xc0] sm:$0xff]
    %v104 = vld [vmem:[#allocation2 + $0xc8] sm:$0xff]
    %v105 = vld [vmem:[#allocation2 + $0xd0] sm:$0xff]
    %v106 = vld [vmem:[#allocation2 + $0xd8] sm:$0xff]
    %v107 = vld [vmem:[#allocation2 + $0xe0] sm:$0xff]
    %v108 = vld [vmem:[#allocation2 + $0xe8] sm:$0xff]
    %v109 = vld [vmem:[#allocation2 + $0xf0] sm:$0xff]
    %v110 = vld [vmem:[#allocation2 + $0xf8] sm:$0xff]
    %v111 = vld [vmem:[#allocation2 + $0x100] sm:$0xff]
    %v112 = vld [vmem:[#allocation2 + $0x108] sm:$0xff]
    %v113 = vld [vmem:[#allocation2 + $0x110] sm:$0xff]
    %v114 = vld [vmem:[#allocation2 + $0x118] sm:$0xff]
    %v115 = vld [vmem:[#allocation2 + $0x120] sm:$0xff]
    %v116 = vld [vmem:[#allocation2 + $0x128] sm:$0xff]
    %v117 = vld [vmem:[#allocation2 + $0x130] sm:$0xff]
    %v118 = vld [vmem:[#allocation2 + $0x138] sm:$0xff]
    %v119 = vld [vmem:[#allocation2 + $0x140] sm:$0xff]
    %v120 = vld [vmem:[#allocation2 + $0x148] sm:$0xff]
    %v121 = vld [vmem:[#allocation2 + $0x150] sm:$0xff]
    %v122 = vld [vmem:[#allocation2 + $0x158] sm:$0xff]
    %v123 = vld [vmem:[#allocation2 + $0x160] sm:$0xff]
    %v124 = vld [vmem:[#allocation2 + $0x168] sm:$0xff]
    %v125 = vld [vmem:[#allocation2 + $0x170] sm:$0xff]
    %v126 = vld [vmem:[#allocation2 + $0x178] sm:$0xff]
    %v127 = vld [vmem:[#allocation2 + $0x180] sm:$0xff]
    %v128 = vld [vmem:[#allocation2 + $0x188] sm:$0xff]
    %v129 = vld [vmem:[#allocation2 + $0x190] sm:$0xff]
    %v130 = vld [vmem:[#allocation2 + $0x198] sm:$0xff]
    %v131 = vld [vmem:[#allocation2 + $0x1a0] sm:$0xff]
    %v132 = vld [vmem:[#allocation2 + $0x1a8] sm:$0xff]
    %v133 = vld [vmem:[#allocation2 + $0x1b0] sm:$0xff]
    %v134 = vld [vmem:[#allocation2 + $0x1b8] sm:$0xff]
    %v135 = vld [vmem:[#allocation2 + $0x1c0] sm:$0xff]
    %v136 = vld [vmem:[#allocation2 + $0x1c8] sm:$0xff]
    %v137 = vld [vmem:[#allocation2 + $0x1d0] sm:$0xff]
    %v138 = vld [vmem:[#allocation2 + $0x1d8] sm:$0xff]
    %v139 = vld [vmem:[#allocation2 + $0x1e0] sm:$0xff]
    %v140 = vld [vmem:[#allocation2 + $0x1e8] sm:$0xff]
    %v141 = vld [vmem:[#allocation2 + $0x1f0] sm:$0xff]
    %v142 = vld [vmem:[#allocation2 + $0x1f8] sm:$0xff]
    %v143 = vld [vmem:[#allocation2 + $0x200] sm:$0xff]
    %v144 = vld [vmem:[#allocation2 + $0x208] sm:$0xff]
    %v145 = vld [vmem:[#allocation2 + $0x210] sm:$0xff]
    %v146 = vld [vmem:[#allocation2 + $0x218] sm:$0xff]
    %v147 = vld [vmem:[#allocation2 + $0x220] sm:$0xff]
    %v148 = vld [vmem:[#allocation2 + $0x228] sm:$0xff]
    %v149 = vld [vmem:[#allocation2 + $0x230] sm:$0xff]
    %v150 = vld [vmem:[#allocation2 + $0x238] sm:$0xff]
    %v151 = vld [vmem:[#allocation2 + $0x240] sm:$0xff]
    %v152 = vld [vmem:[#allocation2 + $0x248] sm:$0xff]
    %v153 = vld [vmem:[#allocation2 + $0x250] sm:$0xff]
    %v154 = vld [vmem:[#allocation2 + $0x258] sm:$0xff]
    %v155 = vld [vmem:[#allocation2 + $0x260] sm:$0xff]
    %v156 = vld [vmem:[#allocation2 + $0x268] sm:$0xff]
    %v157 = vld [vmem:[#allocation2 + $0x270] sm:$0xff]
    %v158 = vld [vmem:[#allocation2 + $0x278] sm:$0xff]
    %v159 = vld [vmem:[#allocation2 + $0x280] sm:$0xff]
    %v160 = vld [vmem:[#allocation2 + $0x288] sm:$0xff]
    %v161 = vld [vmem:[#allocation2 + $0x290] sm:$0xff]
    %v162 = vld [vmem:[#allocation2 + $0x298] sm:$0xff]
    %v163 = vld [vmem:[#allocation2 + $0x2a0] sm:$0xff]
    %v164 = vld [vmem:[#allocation2 + $0x2a8] sm:$0xff]
    %v165 = vld [vmem:[#allocation2 + $0x2b0] sm:$0xff]
    %v166 = vld [vmem:[#allocation2 + $0x2b8] sm:$0xff]
    %v167 = vld [vmem:[#allocation2 + $0x2c0] sm:$0xff]
    %v168 = vld [vmem:[#allocation2 + $0x2c8] sm:$0xff]
    %v169 = vld [vmem:[#allocation2 + $0x2d0] sm:$0xff]
    %v170 = vld [vmem:[#allocation2 + $0x2d8] sm:$0xff]
    %v171 = vld [vmem:[#allocation2 + $0x2e0] sm:$0xff]
    %v172 = vld [vmem:[#allocation2 + $0x2e8] sm:$0xff]
    %v173 = vld [vmem:[#allocation2 + $0x2f0] sm:$0xff]
    %v174 = vld [vmem:[#allocation2 + $0x2f8] sm:$0xff]
    %v175 = vld [vmem:[#allocation2 + $0x300] sm:$0xff]
    %v176 = vld [vmem:[#allocation2 + $0x308] sm:$0xff]
    %v177 = vld [vmem:[#allocation2 + $0x310] sm:$0xff]
    %v178 = vld [vmem:[#allocation2 + $0x318] sm:$0xff]
    %v179 = vld [vmem:[#allocation2 + $0x320] sm:$0xff]
    %v180 = vld [vmem:[#allocation2 + $0x328] sm:$0xff]
    %v181 = vld [vmem:[#allocation2 + $0x330] sm:$0xff]
    %v182 = vld [vmem:[#allocation2 + $0x338] sm:$0xff]
    %v183 = vld [vmem:[#allocation2 + $0x340] sm:$0xff]
    %v184 = vld [vmem:[#allocation2 + $0x348] sm:$0xff]
    %v185 = vld [vmem:[#allocation2 + $0x350] sm:$0xff]
    %v186 = vld [vmem:[#allocation2 + $0x358] sm:$0xff]
    %v187 = vld [vmem:[#allocation2 + $0x360] sm:$0xff]
    %v188 = vld [vmem:[#allocation2 + $0x368] sm:$0xff]
    %v189 = vld [vmem:[#allocation2 + $0x370] sm:$0xff]
    %v190 = vld [vmem:[#allocation2 + $0x378] sm:$0xff]
    %v191 = vld [vmem:[%s3] sm:$0x3]
    %v193 = vlaneseq
    %v194 = vshrl.u32 %v193, 7
    %v195 = vsub.s32 0, %v194
    %v196 = vrot.slane %v191, %v195
    %v197 = vlaneseq
    %v198 = vshrl.u32 %v197, 7
    %v199 = vsub.s32 1, %v198
    %v200 = vrot.slane %v191, %v199
    %v204 = vcombine.high %v78, %v78
    %v206 = vunpack.c.l.s4 1966171168
    %v207 = vunpack.c.0.s8 %v206
    %v208 = vlaneseq
    %v209 = vshrl.u32 %v208, 7
    %v210 = vsub.s32 %v207, %v209
    %v211 = vrot.slane %v78, %v210
    %v213 = vunpack.c.l.s4 1966171168
    %v214 = vunpack.c.0.s8 %v213
    %v215 = vlaneseq
    %v216 = vshrl.u32 %v215, 7
    %v217 = vsub.s32 %v214, %v216
    %v218 = vrot.slane %v204, %v217
    %v219 = vcombine.high %v211, %v211
    %v220 = vcombine.high %v218, %v218
    %v222 = vunpack.c.l.s4 1966171168
    %v223 = vunpack.c.0.s8 %v222
    %v224 = vlaneseq
    %v225 = vshrl.u32 %v224, 7
    %v226 = vsub.s32 %v223, %v225
    %v227 = vrot.slane %v211, %v226
    %v229 = vunpack.c.l.s4 1966171168
    %v230 = vunpack.c.0.s8 %v229
    %v231 = vlaneseq
    %v232 = vshrl.u32 %v231, 7
    %v233 = vsub.s32 %v230, %v232
    %v234 = vrot.slane %v218, %v233
    %v236 = vunpack.c.l.s4 1966171168
    %v237 = vunpack.c.0.s8 %v236
    %v238 = vlaneseq
    %v239 = vshrl.u32 %v238, 7
    %v240 = vsub.s32 %v237, %v239
    %v241 = vrot.slane %v219, %v240
    %v243 = vunpack.c.l.s4 1966171168
    %v244 = vunpack.c.0.s8 %v243
    %v245 = vlaneseq
    %v246 = vshrl.u32 %v245, 7
    %v247 = vsub.s32 %v244, %v246
    %v248 = vrot.slane %v220, %v247
    %v249 = vcombine.high %v227, %v227
    %v250 = vcombine.high %v234, %v234
    %v251 = vcombine.high %v241, %v241
    %v371 = vunpack.c.l.b16 %v79
    %v372 = vunpack.c.h.b16 %v79
    %v373 = vunpack.c.l.b16 %v80
    %v374 = vunpack.c.h.b16 %v80
    %v375 = vunpack.c.l.b16 %v81
    %v376 = vunpack.c.h.b16 %v81
    %v377 = vunpack.c.l.b16 %v82
    %v378 = vunpack.c.h.b16 %v82
    %v379 = vunpack.c.l.b16 %v83
    %v380 = vunpack.c.h.b16 %v83
    %v381 = vunpack.c.l.b16 %v84
    %v382 = vunpack.c.h.b16 %v84
    %v383 = vunpack.c.l.b16 %v85
    %v384 = vunpack.c.h.b16 %v85
    %v385 = vunpack.c.l.b16 %v86
    %v386 = vunpack.c.h.b16 %v86
    %v387 = vunpack.c.l.b16 %v87
    %v388 = vunpack.c.h.b16 %v87
    %v389 = vunpack.c.l.b16 %v88
    %v390 = vunpack.c.h.b16 %v88
    %v391 = vunpack.c.l.b16 %v89
    %v392 = vunpack.c.h.b16 %v89
    %v393 = vunpack.c.l.b16 %v90
    %v394 = vunpack.c.h.b16 %v90
    %v395 = vunpack.c.l.b16 %v91
    %v396 = vunpack.c.h.b16 %v91
    %v397 = vunpack.c.l.b16 %v92
    %v398 = vunpack.c.h.b16 %v92
    %v399 = vunpack.c.l.b16 %v93
    %v400 = vunpack.c.h.b16 %v93
    %v401 = vunpack.c.l.b16 %v94
    %v402 = vunpack.c.h.b16 %v94
    %v403 = vunpack.c.l.b16 %v95
    %v404 = vunpack.c.h.b16 %v95
    %v405 = vunpack.c.l.b16 %v96
    %v406 = vunpack.c.h.b16 %v96
    %v407 = vunpack.c.l.b16 %v97
    %v408 = vunpack.c.h.b16 %v97
    %v409 = vunpack.c.l.b16 %v98
    %v410 = vunpack.c.h.b16 %v98
    %v411 = vunpack.c.l.b16 %v99
    %v412 = vunpack.c.h.b16 %v99
    %v413 = vunpack.c.l.b16 %v100
    %v414 = vunpack.c.h.b16 %v100
    %v415 = vunpack.c.l.b16 %v101
    %v416 = vunpack.c.h.b16 %v101
    %v417 = vunpack.c.l.b16 %v102
    %v418 = vunpack.c.h.b16 %v102
    %v419 = vunpack.c.l.b16 %v103
    %v420 = vunpack.c.h.b16 %v103
    %v421 = vunpack.c.l.b16 %v104
    %v422 = vunpack.c.h.b16 %v104
    %v423 = vunpack.c.l.b16 %v105
    %v424 = vunpack.c.h.b16 %v105
    %v425 = vunpack.c.l.b16 %v106
    %v426 = vunpack.c.h.b16 %v106
    %v427 = vunpack.c.l.b16 %v107
    %v428 = vunpack.c.h.b16 %v107
    %v429 = vunpack.c.l.b16 %v108
    %v430 = vunpack.c.h.b16 %v108
    %v431 = vunpack.c.l.b16 %v109
    %v432 = vunpack.c.h.b16 %v109
    %v433 = vunpack.c.l.b16 %v110
    %v434 = vunpack.c.h.b16 %v110
    %v435 = vunpack.c.l.b16 %v111
    %v436 = vunpack.c.h.b16 %v111
    %v437 = vunpack.c.l.b16 %v112
    %v438 = vunpack.c.h.b16 %v112
    %v439 = vunpack.c.l.b16 %v113
    %v440 = vunpack.c.h.b16 %v113
    %v441 = vunpack.c.l.b16 %v114
    %v442 = vunpack.c.h.b16 %v114
    %v443 = vunpack.c.l.b16 %v115
    %v444 = vunpack.c.h.b16 %v115
    %v445 = vunpack.c.l.b16 %v116
    %v446 = vunpack.c.h.b16 %v116
    %v447 = vunpack.c.l.b16 %v117
    %v448 = vunpack.c.h.b16 %v117
    %v449 = vunpack.c.l.b16 %v118
    %v450 = vunpack.c.h.b16 %v118
    %v451 = vunpack.c.l.b16 %v119
    %v452 = vunpack.c.h.b16 %v119
    %v453 = vunpack.c.l.b16 %v120
    %v454 = vunpack.c.h.b16 %v120
    %v455 = vunpack.c.l.b16 %v121
    %v456 = vunpack.c.h.b16 %v121
    %v457 = vunpack.c.l.b16 %v122
    %v458 = vunpack.c.h.b16 %v122
    %v459 = vunpack.c.l.b16 %v123
    %v460 = vunpack.c.h.b16 %v123
    %v461 = vunpack.c.l.b16 %v124
    %v462 = vunpack.c.h.b16 %v124
    %v463 = vunpack.c.l.b16 %v125
    %v464 = vunpack.c.h.b16 %v125
    %v465 = vunpack.c.l.b16 %v126
    %v466 = vunpack.c.h.b16 %v126
    %v467 = vunpack.c.l.b16 %v127
    %v468 = vunpack.c.h.b16 %v127
    %v469 = vunpack.c.l.b16 %v128
    %v470 = vunpack.c.h.b16 %v128
    %v471 = vunpack.c.l.b16 %v129
    %v472 = vunpack.c.h.b16 %v129
    %v473 = vunpack.c.l.b16 %v130
    %v474 = vunpack.c.h.b16 %v130
    %v475 = vunpack.c.l.b16 %v131
    %v476 = vunpack.c.h.b16 %v131
    %v477 = vunpack.c.l.b16 %v132
    %v478 = vunpack.c.h.b16 %v132
    %v479 = vunpack.c.l.b16 %v133
    %v480 = vunpack.c.h.b16 %v133
    %v481 = vunpack.c.l.b16 %v134
    %v482 = vunpack.c.h.b16 %v134
    %v483 = vunpack.c.l.b16 %v135
    %v484 = vunpack.c.h.b16 %v135
    %v485 = vunpack.c.l.b16 %v136
    %v486 = vunpack.c.h.b16 %v136
    %v487 = vunpack.c.l.b16 %v137
    %v488 = vunpack.c.h.b16 %v137
    %v489 = vunpack.c.l.b16 %v138
    %v490 = vunpack.c.h.b16 %v138
    %v491 = vunpack.c.l.b16 %v139
    %v492 = vunpack.c.h.b16 %v139
    %v493 = vunpack.c.l.b16 %v140
    %v494 = vunpack.c.h.b16 %v140
    %v495 = vunpack.c.l.b16 %v141
    %v496 = vunpack.c.h.b16 %v141
    %v497 = vunpack.c.l.b16 %v142
    %v498 = vunpack.c.h.b16 %v142
    %v499 = vunpack.c.l.b16 %v143
    %v500 = vunpack.c.h.b16 %v143
    %v501 = vunpack.c.l.b16 %v144
    %v502 = vunpack.c.h.b16 %v144
    %v503 = vunpack.c.l.b16 %v145
    %v504 = vunpack.c.h.b16 %v145
    %v505 = vunpack.c.l.b16 %v146
    %v506 = vunpack.c.h.b16 %v146
    %v507 = vunpack.c.l.b16 %v147
    %v508 = vunpack.c.h.b16 %v147
    %v509 = vunpack.c.l.b16 %v148
    %v510 = vunpack.c.h.b16 %v148
    %v511 = vunpack.c.l.b16 %v149
    %v512 = vunpack.c.h.b16 %v149
    %v513 = vunpack.c.l.b16 %v150
    %v514 = vunpack.c.h.b16 %v150
    %v515 = vunpack.c.l.b16 %v151
    %v516 = vunpack.c.h.b16 %v151
    %v517 = vunpack.c.l.b16 %v152
    %v518 = vunpack.c.h.b16 %v152
    %v519 = vunpack.c.l.b16 %v153
    %v520 = vunpack.c.h.b16 %v153
    %v521 = vunpack.c.l.b16 %v154
    %v522 = vunpack.c.h.b16 %v154
    %v523 = vunpack.c.l.b16 %v155
    %v524 = vunpack.c.h.b16 %v155
    %v525 = vunpack.c.l.b16 %v156
    %v526 = vunpack.c.h.b16 %v156
    %v527 = vunpack.c.l.b16 %v157
    %v528 = vunpack.c.h.b16 %v157
    %v529 = vunpack.c.l.b16 %v158
    %v530 = vunpack.c.h.b16 %v158
    %v531 = vunpack.c.l.b16 %v159
    %v532 = vunpack.c.h.b16 %v159
    %v533 = vunpack.c.l.b16 %v160
    %v534 = vunpack.c.h.b16 %v160
    %v535 = vunpack.c.l.b16 %v161
    %v536 = vunpack.c.h.b16 %v161
    %v537 = vunpack.c.l.b16 %v162
    %v538 = vunpack.c.h.b16 %v162
    %v539 = vunpack.c.l.b16 %v163
    %v540 = vunpack.c.h.b16 %v163
    %v541 = vunpack.c.l.b16 %v164
    %v542 = vunpack.c.h.b16 %v164
    %v543 = vunpack.c.l.b16 %v165
    %v544 = vunpack.c.h.b16 %v165
    %v545 = vunpack.c.l.b16 %v166
    %v546 = vunpack.c.h.b16 %v166
    %v547 = vunpack.c.l.b16 %v167
    %v548 = vunpack.c.h.b16 %v167
    %v549 = vunpack.c.l.b16 %v168
    %v550 = vunpack.c.h.b16 %v168
    %v551 = vunpack.c.l.b16 %v169
    %v552 = vunpack.c.h.b16 %v169
    %v553 = vunpack.c.l.b16 %v170
    %v554 = vunpack.c.h.b16 %v170
    %v555 = vunpack.c.l.b16 %v171
    %v556 = vunpack.c.h.b16 %v171
    %v557 = vunpack.c.l.b16 %v172
    %v558 = vunpack.c.h.b16 %v172
    %v559 = vunpack.c.l.b16 %v173
    %v560 = vunpack.c.h.b16 %v173
    %v561 = vunpack.c.l.b16 %v174
    %v562 = vunpack.c.h.b16 %v174
    %v563 = vunpack.c.l.b16 %v175
    %v564 = vunpack.c.h.b16 %v175
    %v565 = vunpack.c.l.b16 %v176
    %v566 = vunpack.c.h.b16 %v176
    %v567 = vunpack.c.l.b16 %v177
    %v568 = vunpack.c.h.b16 %v177
    %v569 = vunpack.c.l.b16 %v178
    %v570 = vunpack.c.h.b16 %v178
    %v571 = vunpack.c.l.b16 %v179
    %v572 = vunpack.c.h.b16 %v179
    %v573 = vunpack.c.l.b16 %v180
    %v574 = vunpack.c.h.b16 %v180
    %v575 = vunpack.c.l.b16 %v181
    %v576 = vunpack.c.h.b16 %v181
    %v577 = vunpack.c.l.b16 %v182
    %v578 = vunpack.c.h.b16 %v182
    %v579 = vunpack.c.l.b16 %v183
    %v580 = vunpack.c.h.b16 %v183
    %v581 = vunpack.c.l.b16 %v184
    %v582 = vunpack.c.h.b16 %v184
    %v583 = vunpack.c.l.b16 %v185
    %v584 = vunpack.c.h.b16 %v185
    %v585 = vunpack.c.l.b16 %v186
    %v586 = vunpack.c.h.b16 %v186
    %v587 = vunpack.c.l.b16 %v187
    %v588 = vunpack.c.h.b16 %v187
    %v589 = vunpack.c.l.b16 %v188
    %v590 = vunpack.c.h.b16 %v188
    %v591 = vunpack.c.l.b16 %v189
    %v592 = vunpack.c.h.b16 %v189
    %v593 = vunpack.c.l.b16 %v190
    %v594 = vunpack.c.h.b16 %v190
    %v595 = vpack.c.b16 %v373, %v371
    %v596 = vpack.c.b16 %v374, %v372
    %v597 = vpack.c.b16 %v377, %v375
    %v598 = vpack.c.b16 %v378, %v376
    %v599 = vpack.c.b16 %v381, %v379
    %v600 = vpack.c.b16 %v382, %v380
    %v601 = vpack.c.b16 %v385, %v383
    %v602 = vpack.c.b16 %v386, %v384
    %v603 = vpack.c.b16 %v389, %v387
    %v604 = vpack.c.b16 %v390, %v388
    %v605 = vpack.c.b16 %v393, %v391
    %v606 = vpack.c.b16 %v394, %v392
    %v607 = vpack.c.b16 %v397, %v395
    %v608 = vpack.c.b16 %v398, %v396
    %v609 = vpack.c.b16 %v401, %v399
    %v610 = vpack.c.b16 %v402, %v400
    %v611 = vpack.c.b16 %v405, %v403
    %v612 = vpack.c.b16 %v406, %v404
    %v613 = vpack.c.b16 %v409, %v407
    %v614 = vpack.c.b16 %v410, %v408
    %v615 = vpack.c.b16 %v413, %v411
    %v616 = vpack.c.b16 %v414, %v412
    %v617 = vpack.c.b16 %v417, %v415
    %v618 = vpack.c.b16 %v418, %v416
    %v619 = vpack.c.b16 %v421, %v419
    %v620 = vpack.c.b16 %v422, %v420
    %v621 = vpack.c.b16 %v425, %v423
    %v622 = vpack.c.b16 %v426, %v424
    %v623 = vpack.c.b16 %v429, %v427
    %v624 = vpack.c.b16 %v430, %v428
    %v625 = vpack.c.b16 %v433, %v431
    %v626 = vpack.c.b16 %v434, %v432
    %v627 = vpack.c.b16 %v437, %v435
    %v628 = vpack.c.b16 %v438, %v436
    %v629 = vpack.c.b16 %v441, %v439
    %v630 = vpack.c.b16 %v442, %v440
    %v631 = vpack.c.b16 %v445, %v443
    %v632 = vpack.c.b16 %v446, %v444
    %v633 = vpack.c.b16 %v449, %v447
    %v634 = vpack.c.b16 %v450, %v448
    %v635 = vpack.c.b16 %v453, %v451
    %v636 = vpack.c.b16 %v454, %v452
    %v637 = vpack.c.b16 %v457, %v455
    %v638 = vpack.c.b16 %v458, %v456
    %v639 = vpack.c.b16 %v461, %v459
    %v640 = vpack.c.b16 %v462, %v460
    %v641 = vpack.c.b16 %v465, %v463
    %v642 = vpack.c.b16 %v466, %v464
    %v643 = vpack.c.b16 %v469, %v467
    %v644 = vpack.c.b16 %v470, %v468
    %v645 = vpack.c.b16 %v473, %v471
    %v646 = vpack.c.b16 %v474, %v472
    %v647 = vpack.c.b16 %v477, %v475
    %v648 = vpack.c.b16 %v478, %v476
    %v649 = vpack.c.b16 %v481, %v479
    %v650 = vpack.c.b16 %v482, %v480
    %v651 = vpack.c.b16 %v485, %v483
    %v652 = vpack.c.b16 %v486, %v484
    %v653 = vpack.c.b16 %v489, %v487
    %v654 = vpack.c.b16 %v490, %v488
    %v655 = vpack.c.b16 %v493, %v491
    %v656 = vpack.c.b16 %v494, %v492
    %v657 = vpack.c.b16 %v497, %v495
    %v658 = vpack.c.b16 %v498, %v496
    %v659 = vpack.c.b16 %v501, %v499
    %v660 = vpack.c.b16 %v502, %v500
    %v661 = vpack.c.b16 %v505, %v503
    %v662 = vpack.c.b16 %v506, %v504
    %v663 = vpack.c.b16 %v509, %v507
    %v664 = vpack.c.b16 %v510, %v508
    %v665 = vpack.c.b16 %v513, %v511
    %v666 = vpack.c.b16 %v514, %v512
    %v667 = vpack.c.b16 %v517, %v515
    %v668 = vpack.c.b16 %v518, %v516
    %v669 = vpack.c.b16 %v521, %v519
    %v670 = vpack.c.b16 %v522, %v520
    %v671 = vpack.c.b16 %v525, %v523
    %v672 = vpack.c.b16 %v526, %v524
    %v673 = vpack.c.b16 %v529, %v527
    %v674 = vpack.c.b16 %v530, %v528
    %v675 = vpack.c.b16 %v533, %v531
    %v676 = vpack.c.b16 %v534, %v532
    %v677 = vpack.c.b16 %v537, %v535
    %v678 = vpack.c.b16 %v538, %v536
    %v679 = vpack.c.b16 %v541, %v539
    %v680 = vpack.c.b16 %v542, %v540
    %v681 = vpack.c.b16 %v545, %v543
    %v682 = vpack.c.b16 %v546, %v544
    %v683 = vpack.c.b16 %v549, %v547
    %v684 = vpack.c.b16 %v550, %v548
    %v685 = vpack.c.b16 %v553, %v551
    %v686 = vpack.c.b16 %v554, %v552
    %v687 = vpack.c.b16 %v557, %v555
    %v688 = vpack.c.b16 %v558, %v556
    %v689 = vpack.c.b16 %v561, %v559
    %v690 = vpack.c.b16 %v562, %v560
    %v691 = vpack.c.b16 %v565, %v563
    %v692 = vpack.c.b16 %v566, %v564
    %v693 = vpack.c.b16 %v569, %v567
    %v694 = vpack.c.b16 %v570, %v568
    %v695 = vpack.c.b16 %v573, %v571
    %v696 = vpack.c.b16 %v574, %v572
    %v697 = vpack.c.b16 %v577, %v575
    %v698 = vpack.c.b16 %v578, %v576
    %v699 = vpack.c.b16 %v581, %v579
    %v700 = vpack.c.b16 %v582, %v580
    %v701 = vpack.c.b16 %v585, %v583
    %v702 = vpack.c.b16 %v586, %v584
    %v703 = vpack.c.b16 %v589, %v587
    %v704 = vpack.c.b16 %v590, %v588
    %v705 = vpack.c.b16 %v593, %v591
    %v706 = vpack.c.b16 %v594, %v592
    %819 = vmatprep.subr.bf16.mxu0 %v596
    %820 = vmatpush1.bf16.msra.mxu0 %v595
    %821 = vmatprep.subr.bf16.mxu0 %v598
    %822 = vmatpush1.bf16.msra.mxu0 %v597
    %823 = vmatprep.subr.bf16.mxu0 %v600
    %824 = vmatpush1.bf16.msra.mxu0 %v599
    %825 = vmatprep.subr.bf16.mxu0 %v602
    %826 = vmatpush1.bf16.msra.mxu0 %v601
    %827 = vmatprep.subr.bf16.mxu0 %v604
    %828 = vmatpush1.bf16.msra.mxu0 %v603
    %829 = vmatprep.subr.bf16.mxu0 %v606
    %830 = vmatpush1.bf16.msra.mxu0 %v605
    %831 = vmatprep.subr.bf16.mxu0 %v608
    %832 = vmatpush1.bf16.msra.mxu0 %v607
    %833 = vmatprep.subr.bf16.mxu0 %v610
    %834 = vmatpush1.bf16.msra.mxu0 %v609
    %835 = vmatprep.subr.bf16.mxu0 %v612
    %836 = vmatpush1.bf16.msra.mxu0 %v611
    %837 = vmatprep.subr.bf16.mxu0 %v614
    %838 = vmatpush1.bf16.msra.mxu0 %v613
    %839 = vmatprep.subr.bf16.mxu0 %v616
    %840 = vmatpush1.bf16.msra.mxu0 %v615
    %841 = vmatprep.subr.bf16.mxu0 %v618
    %842 = vmatpush1.bf16.msra.mxu0 %v617
    %843 = vmatprep.subr.bf16.mxu0 %v620
    %844 = vmatpush1.bf16.msra.mxu0 %v619
    %845 = vmatprep.subr.bf16.mxu0 %v622
    %846 = vmatpush1.bf16.msra.mxu0 %v621
    %847 = vmatprep.subr.bf16.mxu0 %v624
    %848 = vmatpush1.bf16.msra.mxu0 %v623
    %849 = vmatprep.subr.bf16.mxu0 %v626
    %850 = vmatpush1.bf16.msra.mxu0 %v625
    %851 = vmatprep.mubr.bf16.mxu0 %v241
    %852 = vmatmul.mubr.bf16.gmra.mrb[0].mxu0 %v227
    %v853 = vpop.f32.mrb[0].mxu0
    %v854 = vadd.f32 %v196, %v853
    %v855 = vpop.f32.mrb[0].mxu0
    %v856 = vadd.f32 %v200, %v855
    %v857 = vpop.f32.mrb[0].mxu0
    %v858 = vpop.f32.mrb[0].mxu0
    %859 = vdwg.mxu0
    %860 = vmatprep.subr.bf16.mxu0 %v628
    %861 = vmatpush1.bf16.msra.mxu0 %v627
    %862 = vmatprep.subr.bf16.mxu0 %v630
    %863 = vmatpush1.bf16.msra.mxu0 %v629
    %864 = vmatprep.subr.bf16.mxu0 %v632
    %865 = vmatpush1.bf16.msra.mxu0 %v631
    %866 = vmatprep.subr.bf16.mxu0 %v634
    %867 = vmatpush1.bf16.msra.mxu0 %v633
    %868 = vmatprep.subr.bf16.mxu0 %v636
    %869 = vmatpush1.bf16.msra.mxu0 %v635
    %870 = vmatprep.subr.bf16.mxu0 %v638
    %871 = vmatpush1.bf16.msra.mxu0 %v637
    %872 = vmatprep.subr.bf16.mxu0 %v640
    %873 = vmatpush1.bf16.msra.mxu0 %v639
    %874 = vmatprep.subr.bf16.mxu0 %v642
    %875 = vmatpush1.bf16.msra.mxu0 %v641
    %876 = vmatprep.subr.bf16.mxu0 %v644
    %877 = vmatpush1.bf16.msra.mxu0 %v643
    %878 = vmatprep.subr.bf16.mxu0 %v646
    %879 = vmatpush1.bf16.msra.mxu0 %v645
    %880 = vmatprep.subr.bf16.mxu0 %v648
    %881 = vmatpush1.bf16.msra.mxu0 %v647
    %882 = vmatprep.subr.bf16.mxu0 %v650
    %883 = vmatpush1.bf16.msra.mxu0 %v649
    %884 = vmatprep.subr.bf16.mxu0 %v652
    %885 = vmatpush1.bf16.msra.mxu0 %v651
    %886 = vmatprep.subr.bf16.mxu0 %v654
    %887 = vmatpush1.bf16.msra.mxu0 %v653
    %888 = vmatprep.subr.bf16.mxu0 %v656
    %889 = vmatpush1.bf16.msra.mxu0 %v655
    %890 = vmatprep.subr.bf16.mxu0 %v658
    %891 = vmatpush1.bf16.msra.mxu0 %v657
    %892 = vmatprep.mubr.bf16.mxu0 %v251
    %893 = vmatmul.mubr.bf16.gmra.mrb[0].mxu0 %v249
    %v894 = vpop.f32.mrb[0].mxu0
    %v895 = vadd.f32 %v854, %v894
    %v896 = vpop.f32.mrb[0].mxu0
    %v897 = vadd.f32 %v856, %v896
    %v898 = vpop.f32.mrb[0].mxu0
    %v899 = vpop.f32.mrb[0].mxu0
    %900 = vdwg.mxu0
    %901 = vmatprep.subr.bf16.mxu0 %v660
    %902 = vmatpush1.bf16.msra.mxu0 %v659
    %903 = vmatprep.subr.bf16.mxu0 %v662
    %904 = vmatpush1.bf16.msra.mxu0 %v661
    %905 = vmatprep.subr.bf16.mxu0 %v664
    %906 = vmatpush1.bf16.msra.mxu0 %v663
    %907 = vmatprep.subr.bf16.mxu0 %v666
    %908 = vmatpush1.bf16.msra.mxu0 %v665
    %909 = vmatprep.subr.bf16.mxu0 %v668
    %910 = vmatpush1.bf16.msra.mxu0 %v667
    %911 = vmatprep.subr.bf16.mxu0 %v670
    %912 = vmatpush1.bf16.msra.mxu0 %v669
    %913 = vmatprep.subr.bf16.mxu0 %v672
    %914 = vmatpush1.bf16.msra.mxu0 %v671
    %915 = vmatprep.subr.bf16.mxu0 %v674
    %916 = vmatpush1.bf16.msra.mxu0 %v673
    %917 = vmatprep.subr.bf16.mxu0 %v676
    %918 = vmatpush1.bf16.msra.mxu0 %v675
    %919 = vmatprep.subr.bf16.mxu0 %v678
    %920 = vmatpush1.bf16.msra.mxu0 %v677
    %921 = vmatprep.subr.bf16.mxu0 %v680
    %922 = vmatpush1.bf16.msra.mxu0 %v679
    %923 = vmatprep.subr.bf16.mxu0 %v682
    %924 = vmatpush1.bf16.msra.mxu0 %v681
    %925 = vmatprep.subr.bf16.mxu0 %v684
    %926 = vmatpush1.bf16.msra.mxu0 %v683
    %927 = vmatprep.subr.bf16.mxu0 %v686
    %928 = vmatpush1.bf16.msra.mxu0 %v685
    %929 = vmatprep.subr.bf16.mxu0 %v688
    %930 = vmatpush1.bf16.msra.mxu0 %v687
    %931 = vmatprep.subr.bf16.mxu0 %v690
    %932 = vmatpush1.bf16.msra.mxu0 %v689
    %933 = vmatprep.mubr.bf16.mxu0 %v248
    %934 = vmatmul.mubr.bf16.gmra.mrb[0].mxu0 %v234
    %v935 = vpop.f32.mrb[0].mxu0
    %v936 = vadd.f32 %v895, %v935
    %v937 = vpop.f32.mrb[0].mxu0
    %v938 = vadd.f32 %v897, %v937
    %v939 = vpop.f32.mrb[0].mxu0
    %v940 = vpop.f32.mrb[0].mxu0
    %941 = vdwg.mxu0
    %942 = vmatprep.subr.bf16.mxu0 %v692
    %943 = vmatpush1.bf16.msra.mxu0 %v691
    %944 = vmatprep.subr.bf16.mxu0 %v694
    %945 = vmatpush1.bf16.msra.mxu0 %v693
    %946 = vmatprep.subr.bf16.mxu0 %v696
    %947 = vmatpush1.bf16.msra.mxu0 %v695
    %948 = vmatprep.subr.bf16.mxu0 %v698
    %949 = vmatpush1.bf16.msra.mxu0 %v697
    %950 = vmatprep.subr.bf16.mxu0 %v700
    %951 = vmatpush1.bf16.msra.mxu0 %v699
    %952 = vmatprep.subr.bf16.mxu0 %v702
    %953 = vmatpush1.bf16.msra.mxu0 %v701
    %954 = vmatprep.subr.bf16.mxu0 %v704
    %955 = vmatpush1.bf16.msra.mxu0 %v703
    %956 = vmatprep.subr.bf16.mxu0 %v706
    %957 = vmatpush1.bf16.msra.mxu0 %v705
    %958 = vmatprep.subr.bf16.mxu0 0
    %959 = vmatpush1.bf16.msra.mxu0 0
    %960 = vmatprep.subr.bf16.mxu0 0
    %961 = vmatpush1.bf16.msra.mxu0 0
    %962 = vmatprep.subr.bf16.mxu0 0
    %963 = vmatpush1.bf16.msra.mxu0 0
    %964 = vmatprep.subr.bf16.mxu0 0
    %965 = vmatpush1.bf16.msra.mxu0 0
    %966 = vmatprep.subr.bf16.mxu0 0
    %967 = vmatpush1.bf16.msra.mxu0 0
    %968 = vmatprep.subr.bf16.mxu0 0
    %969 = vmatpush1.bf16.msra.mxu0 0
    %970 = vmatprep.subr.bf16.mxu0 0
    %971 = vmatpush1.bf16.msra.mxu0 0
    %972 = vmatprep.subr.bf16.mxu0 0
    %973 = vmatpush1.bf16.msra.mxu0 0
    %974 = vmatprep.mubr.bf16.mxu0 0
    %975 = vmatmul.mubr.bf16.gmra.mrb[0].mxu0 %v250
    %v976 = vpop.f32.mrb[0].mxu0
    %v977 = vadd.f32 %v936, %v976
    %v978 = vpop.f32.mrb[0].mxu0
    %v979 = vadd.f32 %v938, %v978
    %v980 = vpop.f32.mrb[0].mxu0
    %v981 = vpop.f32.mrb[0].mxu0
    %982 = vdwg.mxu0
    %v983 = vmax.f32 %v977, 0.0
    %v984 = vmax.f32 %v979, 0.0
    %v985 = vpack.c.bf16 %v983, %v983
    %v986 = vpack.c.bf16 %v984, %v984
    %v987 = vld [vmem:[%s4] sm:$0xf]
    %v988 = vld [vmem:[%s4 + $0x4] sm:$0xf]
    %v989 = vld [vmem:[%s4 + $0x8] sm:$0xf]
    %v990 = vld [vmem:[%s4 + $0xc] sm:$0xf]
    %v991 = vld [vmem:[%s4 + $0x10] sm:$0xf]
    %v992 = vld [vmem:[%s4 + $0x14] sm:$0xf]
    %v993 = vld [vmem:[%s4 + $0x18] sm:$0xf]
    %v994 = vld [vmem:[%s4 + $0x1c] sm:$0xf]
    %v995 = vld [vmem:[%s4 + $0x20] sm:$0xf]
    %v996 = vld [vmem:[%s4 + $0x24] sm:$0xf]
    %v997 = vld [vmem:[%s4 + $0x28] sm:$0xf]
    %v998 = vld [vmem:[%s4 + $0x2c] sm:$0xf]
    %v999 = vld [vmem:[%s4 + $0x30] sm:$0xf]
    %v1000 = vld [vmem:[%s4 + $0x34] sm:$0xf]
    %v1001 = vld [vmem:[%s4 + $0x38] sm:$0xf]
    %v1002 = vld [vmem:[%s4 + $0x3c] sm:$0xf]
    %v1003 = vld [vmem:[%s4 + $0x40] sm:$0xf]
    %v1004 = vld [vmem:[%s4 + $0x44] sm:$0xf]
    %v1005 = vld [vmem:[%s4 + $0x48] sm:$0xf]
    %v1006 = vld [vmem:[%s4 + $0x4c] sm:$0xf]
    %v1007 = vld [vmem:[%s4 + $0x50] sm:$0xf]
    %v1008 = vld [vmem:[%s4 + $0x54] sm:$0xf]
    %v1009 = vld [vmem:[%s4 + $0x58] sm:$0xf]
    %v1010 = vld [vmem:[%s4 + $0x5c] sm:$0xf]
    %v1011 = vld [vmem:[%s4 + $0x60] sm:$0xf]
    %v1012 = vld [vmem:[%s4 + $0x64] sm:$0xf]
    %v1013 = vld [vmem:[%s4 + $0x68] sm:$0xf]
    %v1014 = vld [vmem:[%s4 + $0x6c] sm:$0xf]
    %v1015 = vld [vmem:[%s4 + $0x70] sm:$0xf]
    %v1016 = vld [vmem:[%s4 + $0x74] sm:$0xf]
    %v1017 = vld [vmem:[%s4 + $0x78] sm:$0xf]
    %v1018 = vld [vmem:[%s4 + $0x7c] sm:$0xf]
    %v1019 = vld [vmem:[%s5] sm:$0x1]
    %v1021 = vlaneseq
    %v1022 = vshrl.u32 %v1021, 7
    %v1023 = vsub.s32 0, %v1022
    %v1024 = vrot.slane %v1019, %v1023
    %v1058 = vunpack.c.l.b16 %v987
    %v1059 = vunpack.c.l.b16 %v988
    %v1060 = vunpack.c.l.b16 %v989
    %v1061 = vunpack.c.l.b16 %v990
    %v1062 = vunpack.c.l.b16 %v991
    %v1063 = vunpack.c.l.b16 %v992
    %v1064 = vunpack.c.l.b16 %v993
    %v1065 = vunpack.c.l.b16 %v994
    %v1066 = vunpack.c.l.b16 %v995
    %v1067 = vunpack.c.l.b16 %v996
    %v1068 = vunpack.c.l.b16 %v997
    %v1069 = vunpack.c.l.b16 %v998
    %v1070 = vunpack.c.l.b16 %v999
    %v1071 = vunpack.c.l.b16 %v1000
    %v1072 = vunpack.c.l.b16 %v1001
    %v1073 = vunpack.c.l.b16 %v1002
    %v1074 = vunpack.c.l.b16 %v1003
    %v1075 = vunpack.c.l.b16 %v1004
    %v1076 = vunpack.c.l.b16 %v1005
    %v1077 = vunpack.c.l.b16 %v1006
    %v1078 = vunpack.c.l.b16 %v1007
    %v1079 = vunpack.c.l.b16 %v1008
    %v1080 = vunpack.c.l.b16 %v1009
    %v1081 = vunpack.c.l.b16 %v1010
    %v1082 = vunpack.c.l.b16 %v1011
    %v1083 = vunpack.c.l.b16 %v1012
    %v1084 = vunpack.c.l.b16 %v1013
    %v1085 = vunpack.c.l.b16 %v1014
    %v1086 = vunpack.c.l.b16 %v1015
    %v1087 = vunpack.c.l.b16 %v1016
    %v1088 = vunpack.c.l.b16 %v1017
    %v1089 = vunpack.c.l.b16 %v1018
    %v1090 = vpack.c.b16 %v1059, %v1058
    %v1091 = vpack.c.b16 %v1061, %v1060
    %v1092 = vpack.c.b16 %v1063, %v1062
    %v1093 = vpack.c.b16 %v1065, %v1064
    %v1094 = vpack.c.b16 %v1067, %v1066
    %v1095 = vpack.c.b16 %v1069, %v1068
    %v1096 = vpack.c.b16 %v1071, %v1070
    %v1097 = vpack.c.b16 %v1073, %v1072
    %v1098 = vpack.c.b16 %v1075, %v1074
    %v1099 = vpack.c.b16 %v1077, %v1076
    %v1100 = vpack.c.b16 %v1079, %v1078
    %v1101 = vpack.c.b16 %v1081, %v1080
    %v1102 = vpack.c.b16 %v1083, %v1082
    %v1103 = vpack.c.b16 %v1085, %v1084
    %v1104 = vpack.c.b16 %v1087, %v1086
    %v1105 = vpack.c.b16 %v1089, %v1088
    %1122 = vmatprep.subr.bf16.mxu0 0
    %1123 = vmatpush1.bf16.msra.mxu0 %v1090
    %1124 = vmatprep.subr.bf16.mxu0 0
    %1125 = vmatpush1.bf16.msra.mxu0 %v1091
    %1126 = vmatprep.subr.bf16.mxu0 0
    %1127 = vmatpush1.bf16.msra.mxu0 %v1092
    %1128 = vmatprep.subr.bf16.mxu0 0
    %1129 = vmatpush1.bf16.msra.mxu0 %v1093
    %1130 = vmatprep.subr.bf16.mxu0 0
    %1131 = vmatpush1.bf16.msra.mxu0 %v1094
    %1132 = vmatprep.subr.bf16.mxu0 0
    %1133 = vmatpush1.bf16.msra.mxu0 %v1095
    %1134 = vmatprep.subr.bf16.mxu0 0
    %1135 = vmatpush1.bf16.msra.mxu0 %v1096
    %1136 = vmatprep.subr.bf16.mxu0 0
    %1137 = vmatpush1.bf16.msra.mxu0 %v1097
    %1138 = vmatprep.subr.bf16.mxu0 0
    %1139 = vmatpush1.bf16.msra.mxu0 %v1098
    %1140 = vmatprep.subr.bf16.mxu0 0
    %1141 = vmatpush1.bf16.msra.mxu0 %v1099
    %1142 = vmatprep.subr.bf16.mxu0 0
    %1143 = vmatpush1.bf16.msra.mxu0 %v1100
    %1144 = vmatprep.subr.bf16.mxu0 0
    %1145 = vmatpush1.bf16.msra.mxu0 %v1101
    %1146 = vmatprep.subr.bf16.mxu0 0
    %1147 = vmatpush1.bf16.msra.mxu0 %v1102
    %1148 = vmatprep.subr.bf16.mxu0 0
    %1149 = vmatpush1.bf16.msra.mxu0 %v1103
    %1150 = vmatprep.subr.bf16.mxu0 0
    %1151 = vmatpush1.bf16.msra.mxu0 %v1104
    %1152 = vmatprep.subr.bf16.mxu0 0
    %1153 = vmatpush1.bf16.msra.mxu0 %v1105
    %1154 = vmatprep.mubr.bf16.mxu0 %v986
    %1155 = vmatmul.mubr.bf16.gmra.mrb[0].mxu0 %v985
    %v1156 = vpop.f32.mrb[0].mxu0
    %v1157 = vadd.f32 %v1024, %v1156
    %v1158 = vpop.f32.mrb[0].mxu0
    %v1159 = vpop.f32.mrb[0].mxu0
    %v1160 = vpop.f32.mrb[0].mxu0
    %1161 = vdwg.mxu0
    %v1162 = vmax.f32 %v1157, 0.0
    %v1163 = vpack.c.bf16 %v1162, %v1162
    %v1164 = vld [vmem:[%s6] sm:$0xff]
    %v1165 = vld [vmem:[%s6 + $0x8] sm:$0xff]
    %v1166 = vld [vmem:[%s6 + $0x10] sm:$0xff]
    %v1167 = vld [vmem:[%s6 + $0x18] sm:$0xff]
    %v1168 = vld [vmem:[%s6 + $0x20] sm:$0xff]
    %v1169 = vld [vmem:[%s6 + $0x28] sm:$0xff]
    %v1170 = vld [vmem:[%s6 + $0x30] sm:$0xff]
    %v1171 = vld [vmem:[%s6 + $0x38] sm:$0xff]
    %v1172 = vld [vmem:[%s7] sm:$0x3]
    %v1174 = vlaneseq
    %v1175 = vshrl.u32 %v1174, 7
    %v1176 = vsub.s32 0, %v1175
    %v1177 = vrot.slane %v1172, %v1176
    %v1178 = vlaneseq
    %v1179 = vshrl.u32 %v1178, 7
    %v1180 = vsub.s32 1, %v1179
    %v1181 = vrot.slane %v1172, %v1180
    %v1192 = vunpack.c.l.b16 %v1164
    %v1193 = vunpack.c.h.b16 %v1164
    %v1194 = vunpack.c.l.b16 %v1165
    %v1195 = vunpack.c.h.b16 %v1165
    %v1196 = vunpack.c.l.b16 %v1166
    %v1197 = vunpack.c.h.b16 %v1166
    %v1198 = vunpack.c.l.b16 %v1167
    %v1199 = vunpack.c.h.b16 %v1167
    %v1200 = vunpack.c.l.b16 %v1168
    %v1201 = vunpack.c.h.b16 %v1168
    %v1202 = vunpack.c.l.b16 %v1169
    %v1203 = vunpack.c.h.b16 %v1169
    %v1204 = vunpack.c.l.b16 %v1170
    %v1205 = vunpack.c.h.b16 %v1170
    %v1206 = vunpack.c.l.b16 %v1171
    %v1207 = vunpack.c.h.b16 %v1171
    %v1208 = vpack.c.b16 %v1194, %v1192
    %v1209 = vpack.c.b16 %v1195, %v1193
    %v1210 = vpack.c.b16 %v1198, %v1196
    %v1211 = vpack.c.b16 %v1199, %v1197
    %v1212 = vpack.c.b16 %v1202, %v1200
    %v1213 = vpack.c.b16 %v1203, %v1201
    %v1214 = vpack.c.b16 %v1206, %v1204
    %v1215 = vpack.c.b16 %v1207, %v1205
    %vm1224 = vcmask 523264
    %v1226 = vsel %vm1224, %v1163, 0
    %1228 = vmatprep.subr.bf16.mxu0 %v1209
    %1229 = vmatpush1.bf16.msra.mxu0 %v1208
    %1230 = vmatprep.subr.bf16.mxu0 %v1211
    %1231 = vmatpush1.bf16.msra.mxu0 %v1210
    %1232 = vmatprep.subr.bf16.mxu0 %v1213
    %1233 = vmatpush1.bf16.msra.mxu0 %v1212
    %1234 = vmatprep.subr.bf16.mxu0 %v1215
    %1235 = vmatpush1.bf16.msra.mxu0 %v1214
    %1236 = vmatprep.subr.bf16.mxu0 0
    %1237 = vmatpush1.bf16.msra.mxu0 0
    %1238 = vmatprep.subr.bf16.mxu0 0
    %1239 = vmatpush1.bf16.msra.mxu0 0
    %1240 = vmatprep.subr.bf16.mxu0 0
    %1241 = vmatpush1.bf16.msra.mxu0 0
    %1242 = vmatprep.subr.bf16.mxu0 0
    %1243 = vmatpush1.bf16.msra.mxu0 0
    %1244 = vmatprep.subr.bf16.mxu0 0
    %1245 = vmatpush1.bf16.msra.mxu0 0
    %1246 = vmatprep.subr.bf16.mxu0 0
    %1247 = vmatpush1.bf16.msra.mxu0 0
    %1248 = vmatprep.subr.bf16.mxu0 0
    %1249 = vmatpush1.bf16.msra.mxu0 0
    %1250 = vmatprep.subr.bf16.mxu0 0
    %1251 = vmatpush1.bf16.msra.mxu0 0
    %1252 = vmatprep.subr.bf16.mxu0 0
    %1253 = vmatpush1.bf16.msra.mxu0 0
    %1254 = vmatprep.subr.bf16.mxu0 0
    %1255 = vmatpush1.bf16.msra.mxu0 0
    %1256 = vmatprep.subr.bf16.mxu0 0
    %1257 = vmatpush1.bf16.msra.mxu0 0
    %1258 = vmatprep.subr.bf16.mxu0 0
    %1259 = vmatpush1.bf16.msra.mxu0 0
    %1260 = vmatprep.mubr.bf16.mxu0 0
    %1261 = vmatmul.mubr.bf16.gmra.mrb[0].mxu0 %v1226
    %v1262 = vpop.f32.mrb[0].mxu0
    %v1263 = vadd.f32 %v1177, %v1262
    %v1264 = vpop.f32.mrb[0].mxu0
    %v1265 = vadd.f32 %v1181, %v1264
    %v1266 = vpop.f32.mrb[0].mxu0
    %v1267 = vpop.f32.mrb[0].mxu0
    %1268 = vdwg.mxu0
    %v1269 = vmax.f32 %v1263, 0.0
    %v1270 = vmax.f32 %v1265, 0.0
    %v1271 = vld [vmem:[%s1] sm:$0x1]
    %v1272 = vunpack.c.l.bf16 %v1271
    %v1273 = vmul.f32 %v1270, %v1272
    %v1274 = vadd.f32 %v1269, %v1273
    %v1275 = vpack.c.bf16 %v1274, %v1274
    %v1276 = vld [vmem:[%s8] sm:$0xf]
    %v1277 = vld [vmem:[%s8 + $0x4] sm:$0xf]
    %v1278 = vld [vmem:[%s8 + $0x8] sm:$0xf]
    %v1279 = vld [vmem:[%s8 + $0xc] sm:$0xf]
    %v1280 = vld [vmem:[%s8 + $0x10] sm:$0xf]
    %v1281 = vld [vmem:[%s8 + $0x14] sm:$0xf]
    %v1282 = vld [vmem:[%s8 + $0x18] sm:$0xf]
    %v1283 = vld [vmem:[%s8 + $0x1c] sm:$0xf]
    %v1284 = vld [vmem:[%s8 + $0x20] sm:$0xf]
    %v1285 = vld [vmem:[%s8 + $0x24] sm:$0xf]
    %v1286 = vld [vmem:[%s8 + $0x28] sm:$0xf]
    %v1287 = vld [vmem:[%s8 + $0x2c] sm:$0xf]
    %v1288 = vld [vmem:[%s8 + $0x30] sm:$0xf]
    %v1289 = vld [vmem:[%s8 + $0x34] sm:$0xf]
    %v1290 = vld [vmem:[%s8 + $0x38] sm:$0xf]
    %v1291 = vld [vmem:[%s8 + $0x3c] sm:$0xf]
    %v1292 = vld [vmem:[%s9] sm:$0x1]
    %v1294 = vlaneseq
    %v1295 = vshrl.u32 %v1294, 7
    %v1296 = vsub.s32 0, %v1295
    %v1297 = vrot.slane %v1292, %v1296
    %v1315 = vunpack.c.l.b16 %v1276
    %v1316 = vunpack.c.l.b16 %v1277
    %v1317 = vunpack.c.l.b16 %v1278
    %v1318 = vunpack.c.l.b16 %v1279
    %v1319 = vunpack.c.l.b16 %v1280
    %v1320 = vunpack.c.l.b16 %v1281
    %v1321 = vunpack.c.l.b16 %v1282
    %v1322 = vunpack.c.l.b16 %v1283
    %v1323 = vunpack.c.l.b16 %v1284
    %v1324 = vunpack.c.l.b16 %v1285
    %v1325 = vunpack.c.l.b16 %v1286
    %v1326 = vunpack.c.l.b16 %v1287
    %v1327 = vunpack.c.l.b16 %v1288
    %v1328 = vunpack.c.l.b16 %v1289
    %v1329 = vunpack.c.l.b16 %v1290
    %v1330 = vunpack.c.l.b16 %v1291
    %v1331 = vpack.c.b16 %v1316, %v1315
    %v1332 = vpack.c.b16 %v1318, %v1317
    %v1333 = vpack.c.b16 %v1320, %v1319
    %v1334 = vpack.c.b16 %v1322, %v1321
    %v1335 = vpack.c.b16 %v1324, %v1323
    %v1336 = vpack.c.b16 %v1326, %v1325
    %v1337 = vpack.c.b16 %v1328, %v1327
    %v1338 = vpack.c.b16 %v1330, %v1329
    %1347 = vmatprep.subr.bf16.mxu0 0
    %1348 = vmatpush1.bf16.msra.mxu0 %v1331
    %1349 = vmatprep.subr.bf16.mxu0 0
    %1350 = vmatpush1.bf16.msra.mxu0 %v1332
    %1351 = vmatprep.subr.bf16.mxu0 0
    %1352 = vmatpush1.bf16.msra.mxu0 %v1333
    %1353 = vmatprep.subr.bf16.mxu0 0
    %1354 = vmatpush1.bf16.msra.mxu0 %v1334
    %1355 = vmatprep.subr.bf16.mxu0 0
    %1356 = vmatpush1.bf16.msra.mxu0 %v1335
    %1357 = vmatprep.subr.bf16.mxu0 0
    %1358 = vmatpush1.bf16.msra.mxu0 %v1336
    %1359 = vmatprep.subr.bf16.mxu0 0
    %1360 = vmatpush1.bf16.msra.mxu0 %v1337
    %1361 = vmatprep.subr.bf16.mxu0 0
    %1362 = vmatpush1.bf16.msra.mxu0 %v1338
    %1363 = vmatprep.subr.bf16.mxu0 0
    %1364 = vmatpush1.bf16.msra.mxu0 0
    %1365 = vmatprep.subr.bf16.mxu0 0
    %1366 = vmatpush1.bf16.msra.mxu0 0
    %1367 = vmatprep.subr.bf16.mxu0 0
    %1368 = vmatpush1.bf16.msra.mxu0 0
    %1369 = vmatprep.subr.bf16.mxu0 0
    %1370 = vmatpush1.bf16.msra.mxu0 0
    %1371 = vmatprep.subr.bf16.mxu0 0
    %1372 = vmatpush1.bf16.msra.mxu0 0
    %1373 = vmatprep.subr.bf16.mxu0 0
    %1374 = vmatpush1.bf16.msra.mxu0 0
    %1375 = vmatprep.subr.bf16.mxu0 0
    %1376 = vmatpush1.bf16.msra.mxu0 0
    %1377 = vmatprep.subr.bf16.mxu0 0
    %1378 = vmatpush1.bf16.msra.mxu0 0
    %1379 = vmatprep.mubr.bf16.mxu0 0
    %1380 = vmatmul.mubr.bf16.gmra.mrb[0].mxu0 %v1275
    %v1381 = vpop.f32.mrb[0].mxu0
    %v1382 = vadd.f32 %v1297, %v1381
    %v1383 = vpop.f32.mrb[0].mxu0
    %v1384 = vpop.f32.mrb[0].mxu0
    %v1385 = vpop.f32.mrb[0].mxu0
    %1386 = vdwg.mxu0
    %v1387 = vmax.f32 %v1382, 0.0
    %v1388 = vpack.c.bf16 %v1387, %v1387
    %v1389 = vld [vmem:[%s10] sm:$0xff]
    %v1390 = vld [vmem:[%s10 + $0x8] sm:$0xff]
    %v1391 = vld [vmem:[%s10 + $0x10] sm:$0xff]
    %v1392 = vld [vmem:[%s10 + $0x18] sm:$0xff]
    %v1393 = vld [vmem:[%s10 + $0x20] sm:$0xff]
    %v1394 = vld [vmem:[%s10 + $0x28] sm:$0xff]
    %v1395 = vld [vmem:[%s10 + $0x30] sm:$0xff]
    %v1396 = vld [vmem:[%s10 + $0x38] sm:$0xff]
    %v1397 = vld [vmem:[%s11] sm:$0x3]
    %v1399 = vlaneseq
    %v1400 = vshrl.u32 %v1399, 7
    %v1401 = vsub.s32 0, %v1400
    %v1402 = vrot.slane %v1397, %v1401
    %v1403 = vlaneseq
    %v1404 = vshrl.u32 %v1403, 7
    %v1405 = vsub.s32 1, %v1404
    %v1406 = vrot.slane %v1397, %v1405
    %v1417 = vunpack.c.l.b16 %v1389
    %v1418 = vunpack.c.h.b16 %v1389
    %v1419 = vunpack.c.l.b16 %v1390
    %v1420 = vunpack.c.h.b16 %v1390
    %v1421 = vunpack.c.l.b16 %v1391
    %v1422 = vunpack.c.h.b16 %v1391
    %v1423 = vunpack.c.l.b16 %v1392
    %v1424 = vunpack.c.h.b16 %v1392
    %v1425 = vunpack.c.l.b16 %v1393
    %v1426 = vunpack.c.h.b16 %v1393
    %v1427 = vunpack.c.l.b16 %v1394
    %v1428 = vunpack.c.h.b16 %v1394
    %v1429 = vunpack.c.l.b16 %v1395
    %v1430 = vunpack.c.h.b16 %v1395
    %v1431 = vunpack.c.l.b16 %v1396
    %v1432 = vunpack.c.h.b16 %v1396
    %v1433 = vpack.c.b16 %v1419, %v1417
    %v1434 = vpack.c.b16 %v1420, %v1418
    %v1435 = vpack.c.b16 %v1423, %v1421
    %v1436 = vpack.c.b16 %v1424, %v1422
    %v1437 = vpack.c.b16 %v1427, %v1425
    %v1438 = vpack.c.b16 %v1428, %v1426
    %v1439 = vpack.c.b16 %v1431, %v1429
    %v1440 = vpack.c.b16 %v1432, %v1430
    %v1450 = vsel %vm1224, %v1388, 0
    %1452 = vmatprep.subr.bf16.mxu0 %v1434
    %1453 = vmatpush1.bf16.msra.mxu0 %v1433
    %1454 = vmatprep.subr.bf16.mxu0 %v1436
    %1455 = vmatpush1.bf16.msra.mxu0 %v1435
    %1456 = vmatprep.subr.bf16.mxu0 %v1438
    %1457 = vmatpush1.bf16.msra.mxu0 %v1437
    %1458 = vmatprep.subr.bf16.mxu0 %v1440
    %1459 = vmatpush1.bf16.msra.mxu0 %v1439
    %1460 = vmatprep.subr.bf16.mxu0 0
    %1461 = vmatpush1.bf16.msra.mxu0 0
    %1462 = vmatprep.subr.bf16.mxu0 0
    %1463 = vmatpush1.bf16.msra.mxu0 0
    %1464 = vmatprep.subr.bf16.mxu0 0
    %1465 = vmatpush1.bf16.msra.mxu0 0
    %1466 = vmatprep.subr.bf16.mxu0 0
    %1467 = vmatpush1.bf16.msra.mxu0 0
    %1468 = vmatprep.subr.bf16.mxu0 0
    %1469 = vmatpush1.bf16.msra.mxu0 0
    %1470 = vmatprep.subr.bf16.mxu0 0
    %1471 = vmatpush1.bf16.msra.mxu0 0
    %1472 = vmatprep.subr.bf16.mxu0 0
    %1473 = vmatpush1.bf16.msra.mxu0 0
    %1474 = vmatprep.subr.bf16.mxu0 0
    %1475 = vmatpush1.bf16.msra.mxu0 0
    %1476 = vmatprep.subr.bf16.mxu0 0
    %1477 = vmatpush1.bf16.msra.mxu0 0
    %1478 = vmatprep.subr.bf16.mxu0 0
    %1479 = vmatpush1.bf16.msra.mxu0 0
    %1480 = vmatprep.subr.bf16.mxu0 0
    %1481 = vmatpush1.bf16.msra.mxu0 0
    %1482 = vmatprep.subr.bf16.mxu0 0
    %1483 = vmatpush1.bf16.msra.mxu0 0
    %1484 = vmatprep.mubr.bf16.mxu0 0
    %1485 = vmatmul.mubr.bf16.gmra.mrb[0].mxu0 %v1450
    %v1486 = vpop.f32.mrb[0].mxu0
    %v1487 = vadd.f32 %v1402, %v1486
    %v1488 = vpop.f32.mrb[0].mxu0
    %v1489 = vadd.f32 %v1406, %v1488
    %v1490 = vpop.f32.mrb[0].mxu0
    %v1491 = vpop.f32.mrb[0].mxu0
    %1492 = vdwg.mxu0
    %v1493 = vmax.f32 %v1487, 0.0
    %v1494 = vmax.f32 %v1489, 0.0
    %v1495 = vpack.c.bf16 %v1493, %v1493
    %v1496 = vpack.c.bf16 %v1494, %v1494
    %v1497 = vld [vmem:[#allocation4] sm:$0xff]
    %v1498 = vld [vmem:[#allocation4 + $0x8] sm:$0xff]
    %v1499 = vld [vmem:[#allocation4 + $0x10] sm:$0xff]
    %v1500 = vld [vmem:[#allocation4 + $0x18] sm:$0xf]
    %v1501 = vld [vmem:[#allocation4 + $0x1c] sm:$0xff]
    %v1502 = vld [vmem:[#allocation4 + $0x24] sm:$0xff]
    %v1503 = vld [vmem:[#allocation4 + $0x2c] sm:$0xff]
    %v1504 = vld [vmem:[#allocation4 + $0x34] sm:$0xf]
    %v1505 = vld [vmem:[#allocation4 + $0x38] sm:$0xff]
    %v1506 = vld [vmem:[#allocation4 + $0x40] sm:$0xff]
    %v1507 = vld [vmem:[#allocation4 + $0x48] sm:$0xff]
    %v1508 = vld [vmem:[#allocation4 + $0x50] sm:$0xf]
    %v1509 = vld [vmem:[#allocation4 + $0x54] sm:$0xff]
    %v1510 = vld [vmem:[#allocation4 + $0x5c] sm:$0xff]
    %v1511 = vld [vmem:[#allocation4 + $0x64] sm:$0xff]
    %v1512 = vld [vmem:[#allocation4 + $0x6c] sm:$0xf]
    %v1513 = vld [vmem:[#allocation4 + $0x70] sm:$0xff]
    %v1514 = vld [vmem:[#allocation4 + $0x78] sm:$0xff]
    %v1515 = vld [vmem:[#allocation4 + $0x80] sm:$0xff]
    %v1516 = vld [vmem:[#allocation4 + $0x88] sm:$0xf]
    %v1517 = vld [vmem:[#allocation4 + $0x8c] sm:$0xff]
    %v1518 = vld [vmem:[#allocation4 + $0x94] sm:$0xff]
    %v1519 = vld [vmem:[#allocation4 + $0x9c] sm:$0xff]
    %v1520 = vld [vmem:[#allocation4 + $0xa4] sm:$0xf]
    %v1521 = vld [vmem:[#allocation4 + $0xa8] sm:$0xff]
    %v1522 = vld [vmem:[#allocation4 + $0xb0] sm:$0xff]
    %v1523 = vld [vmem:[#allocation4 + $0xb8] sm:$0xff]
    %v1524 = vld [vmem:[#allocation4 + $0xc0] sm:$0xf]
    %v1525 = vld [vmem:[#allocation4 + $0xc4] sm:$0xff]
    %v1526 = vld [vmem:[#allocation4 + $0xcc] sm:$0xff]
    %v1527 = vld [vmem:[#allocation4 + $0xd4] sm:$0xff]
    %v1528 = vld [vmem:[#allocation4 + $0xdc] sm:$0xf]
    %v1529 = vld [vmem:[#allocation4 + $0xe0] sm:$0xff]
    %v1530 = vld [vmem:[#allocation4 + $0xe8] sm:$0xff]
    %v1531 = vld [vmem:[#allocation4 + $0xf0] sm:$0xff]
    %v1532 = vld [vmem:[#allocation4 + $0xf8] sm:$0xf]
    %v1533 = vld [vmem:[#allocation4 + $0xfc] sm:$0xff]
    %v1534 = vld [vmem:[#allocation4 + $0x104] sm:$0xff]
    %v1535 = vld [vmem:[#allocation4 + $0x10c] sm:$0xff]
    %v1536 = vld [vmem:[#allocation4 + $0x114] sm:$0xf]
    %v1537 = vld [vmem:[#allocation4 + $0x118] sm:$0xff]
    %v1538 = vld [vmem:[#allocation4 + $0x120] sm:$0xff]
    %v1539 = vld [vmem:[#allocation4 + $0x128] sm:$0xff]
    %v1540 = vld [vmem:[#allocation4 + $0x130] sm:$0xf]
    %v1541 = vld [vmem:[#allocation4 + $0x134] sm:$0xff]
    %v1542 = vld [vmem:[#allocation4 + $0x13c] sm:$0xff]
    %v1543 = vld [vmem:[#allocation4 + $0x144] sm:$0xff]
    %v1544 = vld [vmem:[#allocation4 + $0x14c] sm:$0xf]
    %v1545 = vld [vmem:[#allocation4 + $0x150] sm:$0xff]
    %v1546 = vld [vmem:[#allocation4 + $0x158] sm:$0xff]
    %v1547 = vld [vmem:[#allocation4 + $0x160] sm:$0xff]
    %v1548 = vld [vmem:[#allocation4 + $0x168] sm:$0xf]
    %v1549 = vld [vmem:[#allocation4 + $0x16c] sm:$0xff]
    %v1550 = vld [vmem:[#allocation4 + $0x174] sm:$0xff]
    %v1551 = vld [vmem:[#allocation4 + $0x17c] sm:$0xff]
    %v1552 = vld [vmem:[#allocation4 + $0x184] sm:$0xf]
    %v1553 = vld [vmem:[#allocation4 + $0x188] sm:$0xff]
    %v1554 = vld [vmem:[#allocation4 + $0x190] sm:$0xff]
    %v1555 = vld [vmem:[#allocation4 + $0x198] sm:$0xff]
    %v1556 = vld [vmem:[#allocation4 + $0x1a0] sm:$0xf]
    %v1557 = vld [vmem:[#allocation4 + $0x1a4] sm:$0xff]
    %v1558 = vld [vmem:[#allocation4 + $0x1ac] sm:$0xff]
    %v1559 = vld [vmem:[#allocation4 + $0x1b4] sm:$0xff]
    %v1560 = vld [vmem:[#allocation4 + $0x1bc] sm:$0xf]
    %v1561 = vld [vmem:[#allocation4 + $0x1c0] sm:$0xff]
    %v1562 = vld [vmem:[#allocation4 + $0x1c8] sm:$0xff]
    %v1563 = vld [vmem:[#allocation4 + $0x1d0] sm:$0xff]
    %v1564 = vld [vmem:[#allocation4 + $0x1d8] sm:$0xf]
    %v1565 = vld [vmem:[#allocation4 + $0x1dc] sm:$0xff]
    %v1566 = vld [vmem:[#allocation4 + $0x1e4] sm:$0xff]
    %v1567 = vld [vmem:[#allocation4 + $0x1ec] sm:$0xff]
    %v1568 = vld [vmem:[#allocation4 + $0x1f4] sm:$0xf]
    %v1569 = vld [vmem:[#allocation4 + $0x1f8] sm:$0xff]
    %v1570 = vld [vmem:[#allocation4 + $0x200] sm:$0xff]
    %v1571 = vld [vmem:[#allocation4 + $0x208] sm:$0xff]
    %v1572 = vld [vmem:[#allocation4 + $0x210] sm:$0xf]
    %v1573 = vld [vmem:[#allocation4 + $0x214] sm:$0xff]
    %v1574 = vld [vmem:[#allocation4 + $0x21c] sm:$0xff]
    %v1575 = vld [vmem:[#allocation4 + $0x224] sm:$0xff]
    %v1576 = vld [vmem:[#allocation4 + $0x22c] sm:$0xf]
    %v1577 = vld [vmem:[#allocation4 + $0x230] sm:$0xff]
    %v1578 = vld [vmem:[#allocation4 + $0x238] sm:$0xff]
    %v1579 = vld [vmem:[#allocation4 + $0x240] sm:$0xff]
    %v1580 = vld [vmem:[#allocation4 + $0x248] sm:$0xf]
    %v1581 = vld [vmem:[#allocation4 + $0x24c] sm:$0xff]
    %v1582 = vld [vmem:[#allocation4 + $0x254] sm:$0xff]
    %v1583 = vld [vmem:[#allocation4 + $0x25c] sm:$0xff]
    %v1584 = vld [vmem:[#allocation4 + $0x264] sm:$0xf]
    %v1585 = vld [vmem:[#allocation4 + $0x268] sm:$0xff]
    %v1586 = vld [vmem:[#allocation4 + $0x270] sm:$0xff]
    %v1587 = vld [vmem:[#allocation4 + $0x278] sm:$0xff]
    %v1588 = vld [vmem:[#allocation4 + $0x280] sm:$0xf]
    %v1589 = vld [vmem:[#allocation4 + $0x284] sm:$0xff]
    %v1590 = vld [vmem:[#allocation4 + $0x28c] sm:$0xff]
    %v1591 = vld [vmem:[#allocation4 + $0x294] sm:$0xff]
    %v1592 = vld [vmem:[#allocation4 + $0x29c] sm:$0xf]
    %v1593 = vld [vmem:[#allocation4 + $0x2a0] sm:$0xff]
    %v1594 = vld [vmem:[#allocation4 + $0x2a8] sm:$0xff]
    %v1595 = vld [vmem:[#allocation4 + $0x2b0] sm:$0xff]
    %v1596 = vld [vmem:[#allocation4 + $0x2b8] sm:$0xf]
    %v1597 = vld [vmem:[#allocation4 + $0x2bc] sm:$0xff]
    %v1598 = vld [vmem:[#allocation4 + $0x2c4] sm:$0xff]
    %v1599 = vld [vmem:[#allocation4 + $0x2cc] sm:$0xff]
    %v1600 = vld [vmem:[#allocation4 + $0x2d4] sm:$0xf]
    %v1601 = vld [vmem:[#allocation4 + $0x2d8] sm:$0xff]
    %v1602 = vld [vmem:[#allocation4 + $0x2e0] sm:$0xff]
    %v1603 = vld [vmem:[#allocation4 + $0x2e8] sm:$0xff]
    %v1604 = vld [vmem:[#allocation4 + $0x2f0] sm:$0xf]
    %v1605 = vld [vmem:[#allocation4 + $0x2f4] sm:$0xff]
    %v1606 = vld [vmem:[#allocation4 + $0x2fc] sm:$0xff]
    %v1607 = vld [vmem:[#allocation4 + $0x304] sm:$0xff]
    %v1608 = vld [vmem:[#allocation4 + $0x30c] sm:$0xf]
    %v1609 = vld [vmem:[#allocation4 + $0x310] sm:$0xff]
    %v1610 = vld [vmem:[#allocation4 + $0x318] sm:$0xff]
    %v1611 = vld [vmem:[#allocation4 + $0x320] sm:$0xff]
    %v1612 = vld [vmem:[#allocation4 + $0x328] sm:$0xf]
    %v1613 = vld [vmem:[#allocation4 + $0x32c] sm:$0xff]
    %v1614 = vld [vmem:[#allocation4 + $0x334] sm:$0xff]
    %v1615 = vld [vmem:[#allocation4 + $0x33c] sm:$0xff]
    %v1616 = vld [vmem:[#allocation4 + $0x344] sm:$0xf]
    %v1617 = vld [vmem:[#allocation4 + $0x348] sm:$0xff]
    %v1618 = vld [vmem:[#allocation4 + $0x350] sm:$0xff]
    %v1619 = vld [vmem:[#allocation4 + $0x358] sm:$0xff]
    %v1620 = vld [vmem:[#allocation4 + $0x360] sm:$0xf]
    %v1621 = vld [vmem:[#allocation4 + $0x364] sm:$0xff]
    %v1622 = vld [vmem:[#allocation4 + $0x36c] sm:$0xff]
    %v1623 = vld [vmem:[#allocation4 + $0x374] sm:$0xff]
    %v1624 = vld [vmem:[#allocation4 + $0x37c] sm:$0xf]
    %v1625 = vld [vmem:[%s13] sm:$0xff]
    %v1627 = vlaneseq
    %v1628 = vshrl.u32 %v1627, 7
    %v1629 = vsub.s32 0, %v1628
    %v1630 = vrot.slane %v1625, %v1629
    %v1631 = vlaneseq
    %v1632 = vshrl.u32 %v1631, 7
    %v1633 = vsub.s32 1, %v1632
    %v1634 = vrot.slane %v1625, %v1633
    %v1635 = vlaneseq
    %v1636 = vshrl.u32 %v1635, 7
    %v1637 = vsub.s32 2, %v1636
    %v1638 = vrot.slane %v1625, %v1637
    %v1639 = vlaneseq
    %v1640 = vshrl.u32 %v1639, 7
    %v1641 = vsub.s32 3, %v1640
    %v1642 = vrot.slane %v1625, %v1641
    %v1643 = vlaneseq
    %v1644 = vshrl.u32 %v1643, 7
    %v1645 = vsub.s32 4, %v1644
    %v1646 = vrot.slane %v1625, %v1645
    %v1647 = vlaneseq
    %v1648 = vshrl.u32 %v1647, 7
    %v1649 = vsub.s32 5, %v1648
    %v1650 = vrot.slane %v1625, %v1649
    %v1651 = vlaneseq
    %v1652 = vshrl.u32 %v1651, 7
    %v1653 = vsub.s32 6, %v1652
    %v1654 = vrot.slane %v1625, %v1653
    %v1790 = vunpack.c.l.b16 %v1497
    %v1791 = vunpack.c.h.b16 %v1497
    %v1792 = vunpack.c.l.b16 %v1498
    %v1793 = vunpack.c.h.b16 %v1498
    %v1794 = vunpack.c.l.b16 %v1499
    %v1795 = vunpack.c.h.b16 %v1499
    %v1796 = vunpack.c.l.b16 %v1500
    %v1797 = vunpack.c.l.b16 %v1501
    %v1798 = vunpack.c.h.b16 %v1501
    %v1799 = vunpack.c.l.b16 %v1502
    %v1800 = vunpack.c.h.b16 %v1502
    %v1801 = vunpack.c.l.b16 %v1503
    %v1802 = vunpack.c.h.b16 %v1503
    %v1803 = vunpack.c.l.b16 %v1504
    %v1804 = vunpack.c.l.b16 %v1505
    %v1805 = vunpack.c.h.b16 %v1505
    %v1806 = vunpack.c.l.b16 %v1506
    %v1807 = vunpack.c.h.b16 %v1506
    %v1808 = vunpack.c.l.b16 %v1507
    %v1809 = vunpack.c.h.b16 %v1507
    %v1810 = vunpack.c.l.b16 %v1508
    %v1811 = vunpack.c.l.b16 %v1509
    %v1812 = vunpack.c.h.b16 %v1509
    %v1813 = vunpack.c.l.b16 %v1510
    %v1814 = vunpack.c.h.b16 %v1510
    %v1815 = vunpack.c.l.b16 %v1511
    %v1816 = vunpack.c.h.b16 %v1511
    %v1817 = vunpack.c.l.b16 %v1512
    %v1818 = vunpack.c.l.b16 %v1513
    %v1819 = vunpack.c.h.b16 %v1513
    %v1820 = vunpack.c.l.b16 %v1514
    %v1821 = vunpack.c.h.b16 %v1514
    %v1822 = vunpack.c.l.b16 %v1515
    %v1823 = vunpack.c.h.b16 %v1515
    %v1824 = vunpack.c.l.b16 %v1516
    %v1825 = vunpack.c.l.b16 %v1517
    %v1826 = vunpack.c.h.b16 %v1517
    %v1827 = vunpack.c.l.b16 %v1518
    %v1828 = vunpack.c.h.b16 %v1518
    %v1829 = vunpack.c.l.b16 %v1519
    %v1830 = vunpack.c.h.b16 %v1519
    %v1831 = vunpack.c.l.b16 %v1520
    %v1832 = vunpack.c.l.b16 %v1521
    %v1833 = vunpack.c.h.b16 %v1521
    %v1834 = vunpack.c.l.b16 %v1522
    %v1835 = vunpack.c.h.b16 %v1522
    %v1836 = vunpack.c.l.b16 %v1523
    %v1837 = vunpack.c.h.b16 %v1523
    %v1838 = vunpack.c.l.b16 %v1524
    %v1839 = vunpack.c.l.b16 %v1525
    %v1840 = vunpack.c.h.b16 %v1525
    %v1841 = vunpack.c.l.b16 %v1526
    %v1842 = vunpack.c.h.b16 %v1526
    %v1843 = vunpack.c.l.b16 %v1527
    %v1844 = vunpack.c.h.b16 %v1527
    %v1845 = vunpack.c.l.b16 %v1528
    %v1846 = vunpack.c.l.b16 %v1529
    %v1847 = vunpack.c.h.b16 %v1529
    %v1848 = vunpack.c.l.b16 %v1530
    %v1849 = vunpack.c.h.b16 %v1530
    %v1850 = vunpack.c.l.b16 %v1531
    %v1851 = vunpack.c.h.b16 %v1531
    %v1852 = vunpack.c.l.b16 %v1532
    %v1853 = vunpack.c.l.b16 %v1533
    %v1854 = vunpack.c.h.b16 %v1533
    %v1855 = vunpack.c.l.b16 %v1534
    %v1856 = vunpack.c.h.b16 %v1534
    %v1857 = vunpack.c.l.b16 %v1535
    %v1858 = vunpack.c.h.b16 %v1535
    %v1859 = vunpack.c.l.b16 %v1536
    %v1860 = vunpack.c.l.b16 %v1537
    %v1861 = vunpack.c.h.b16 %v1537
    %v1862 = vunpack.c.l.b16 %v1538
    %v1863 = vunpack.c.h.b16 %v1538
    %v1864 = vunpack.c.l.b16 %v1539
    %v1865 = vunpack.c.h.b16 %v1539
    %v1866 = vunpack.c.l.b16 %v1540
    %v1867 = vunpack.c.l.b16 %v1541
    %v1868 = vunpack.c.h.b16 %v1541
    %v1869 = vunpack.c.l.b16 %v1542
    %v1870 = vunpack.c.h.b16 %v1542
    %v1871 = vunpack.c.l.b16 %v1543
    %v1872 = vunpack.c.h.b16 %v1543
    %v1873 = vunpack.c.l.b16 %v1544
    %v1874 = vunpack.c.l.b16 %v1545
    %v1875 = vunpack.c.h.b16 %v1545
    %v1876 = vunpack.c.l.b16 %v1546
    %v1877 = vunpack.c.h.b16 %v1546
    %v1878 = vunpack.c.l.b16 %v1547
    %v1879 = vunpack.c.h.b16 %v1547
    %v1880 = vunpack.c.l.b16 %v1548
    %v1881 = vunpack.c.l.b16 %v1549
    %v1882 = vunpack.c.h.b16 %v1549
    %v1883 = vunpack.c.l.b16 %v1550
    %v1884 = vunpack.c.h.b16 %v1550
    %v1885 = vunpack.c.l.b16 %v1551
    %v1886 = vunpack.c.h.b16 %v1551
    %v1887 = vunpack.c.l.b16 %v1552
    %v1888 = vunpack.c.l.b16 %v1553
    %v1889 = vunpack.c.h.b16 %v1553
    %v1890 = vunpack.c.l.b16 %v1554
    %v1891 = vunpack.c.h.b16 %v1554
    %v1892 = vunpack.c.l.b16 %v1555
    %v1893 = vunpack.c.h.b16 %v1555
    %v1894 = vunpack.c.l.b16 %v1556
    %v1895 = vunpack.c.l.b16 %v1557
    %v1896 = vunpack.c.h.b16 %v1557
    %v1897 = vunpack.c.l.b16 %v1558
    %v1898 = vunpack.c.h.b16 %v1558
    %v1899 = vunpack.c.l.b16 %v1559
    %v1900 = vunpack.c.h.b16 %v1559
    %v1901 = vunpack.c.l.b16 %v1560
    %v1902 = vunpack.c.l.b16 %v1561
    %v1903 = vunpack.c.h.b16 %v1561
    %v1904 = vunpack.c.l.b16 %v1562
    %v1905 = vunpack.c.h.b16 %v1562
    %v1906 = vunpack.c.l.b16 %v1563
    %v1907 = vunpack.c.h.b16 %v1563
    %v1908 = vunpack.c.l.b16 %v1564
    %v1909 = vunpack.c.l.b16 %v1565
    %v1910 = vunpack.c.h.b16 %v1565
    %v1911 = vunpack.c.l.b16 %v1566
    %v1912 = vunpack.c.h.b16 %v1566
    %v1913 = vunpack.c.l.b16 %v1567
    %v1914 = vunpack.c.h.b16 %v1567
    %v1915 = vunpack.c.l.b16 %v1568
    %v1916 = vunpack.c.l.b16 %v1569
    %v1917 = vunpack.c.h.b16 %v1569
    %v1918 = vunpack.c.l.b16 %v1570
    %v1919 = vunpack.c.h.b16 %v1570
    %v1920 = vunpack.c.l.b16 %v1571
    %v1921 = vunpack.c.h.b16 %v1571
    %v1922 = vunpack.c.l.b16 %v1572
    %v1923 = vunpack.c.l.b16 %v1573
    %v1924 = vunpack.c.h.b16 %v1573
    %v1925 = vunpack.c.l.b16 %v1574
    %v1926 = vunpack.c.h.b16 %v1574
    %v1927 = vunpack.c.l.b16 %v1575
    %v1928 = vunpack.c.h.b16 %v1575
    %v1929 = vunpack.c.l.b16 %v1576
    %v1930 = vunpack.c.l.b16 %v1577
    %v1931 = vunpack.c.h.b16 %v1577
    %v1932 = vunpack.c.l.b16 %v1578
    %v1933 = vunpack.c.h.b16 %v1578
    %v1934 = vunpack.c.l.b16 %v1579
    %v1935 = vunpack.c.h.b16 %v1579
    %v1936 = vunpack.c.l.b16 %v1580
    %v1937 = vunpack.c.l.b16 %v1581
    %v1938 = vunpack.c.h.b16 %v1581
    %v1939 = vunpack.c.l.b16 %v1582
    %v1940 = vunpack.c.h.b16 %v1582
    %v1941 = vunpack.c.l.b16 %v1583
    %v1942 = vunpack.c.h.b16 %v1583
    %v1943 = vunpack.c.l.b16 %v1584
    %v1944 = vunpack.c.l.b16 %v1585
    %v1945 = vunpack.c.h.b16 %v1585
    %v1946 = vunpack.c.l.b16 %v1586
    %v1947 = vunpack.c.h.b16 %v1586
    %v1948 = vunpack.c.l.b16 %v1587
    %v1949 = vunpack.c.h.b16 %v1587
    %v1950 = vunpack.c.l.b16 %v1588
    %v1951 = vunpack.c.l.b16 %v1589
    %v1952 = vunpack.c.h.b16 %v1589
    %v1953 = vunpack.c.l.b16 %v1590
    %v1954 = vunpack.c.h.b16 %v1590
    %v1955 = vunpack.c.l.b16 %v1591
    %v1956 = vunpack.c.h.b16 %v1591
    %v1957 = vunpack.c.l.b16 %v1592
    %v1958 = vunpack.c.l.b16 %v1593
    %v1959 = vunpack.c.h.b16 %v1593
    %v1960 = vunpack.c.l.b16 %v1594
    %v1961 = vunpack.c.h.b16 %v1594
    %v1962 = vunpack.c.l.b16 %v1595
    %v1963 = vunpack.c.h.b16 %v1595
    %v1964 = vunpack.c.l.b16 %v1596
    %v1965 = vunpack.c.l.b16 %v1597
    %v1966 = vunpack.c.h.b16 %v1597
    %v1967 = vunpack.c.l.b16 %v1598
    %v1968 = vunpack.c.h.b16 %v1598
    %v1969 = vunpack.c.l.b16 %v1599
    %v1970 = vunpack.c.h.b16 %v1599
    %v1971 = vunpack.c.l.b16 %v1600
    %v1972 = vunpack.c.l.b16 %v1601
    %v1973 = vunpack.c.h.b16 %v1601
    %v1974 = vunpack.c.l.b16 %v1602
    %v1975 = vunpack.c.h.b16 %v1602
    %v1976 = vunpack.c.l.b16 %v1603
    %v1977 = vunpack.c.h.b16 %v1603
    %v1978 = vunpack.c.l.b16 %v1604
    %v1979 = vunpack.c.l.b16 %v1605
    %v1980 = vunpack.c.h.b16 %v1605
    %v1981 = vunpack.c.l.b16 %v1606
    %v1982 = vunpack.c.h.b16 %v1606
    %v1983 = vunpack.c.l.b16 %v1607
    %v1984 = vunpack.c.h.b16 %v1607
    %v1985 = vunpack.c.l.b16 %v1608
    %v1986 = vunpack.c.l.b16 %v1609
    %v1987 = vunpack.c.h.b16 %v1609
    %v1988 = vunpack.c.l.b16 %v1610
    %v1989 = vunpack.c.h.b16 %v1610
    %v1990 = vunpack.c.l.b16 %v1611
    %v1991 = vunpack.c.h.b16 %v1611
    %v1992 = vunpack.c.l.b16 %v1612
    %v1993 = vunpack.c.l.b16 %v1613
    %v1994 = vunpack.c.h.b16 %v1613
    %v1995 = vunpack.c.l.b16 %v1614
    %v1996 = vunpack.c.h.b16 %v1614
    %v1997 = vunpack.c.l.b16 %v1615
    %v1998 = vunpack.c.h.b16 %v1615
    %v1999 = vunpack.c.l.b16 %v1616
    %v2000 = vunpack.c.l.b16 %v1617
    %v2001 = vunpack.c.h.b16 %v1617
    %v2002 = vunpack.c.l.b16 %v1618
    %v2003 = vunpack.c.h.b16 %v1618
    %v2004 = vunpack.c.l.b16 %v1619
    %v2005 = vunpack.c.h.b16 %v1619
    %v2006 = vunpack.c.l.b16 %v1620
    %v2007 = vunpack.c.l.b16 %v1621
    %v2008 = vunpack.c.h.b16 %v1621
    %v2009 = vunpack.c.l.b16 %v1622
    %v2010 = vunpack.c.h.b16 %v1622
    %v2011 = vunpack.c.l.b16 %v1623
    %v2012 = vunpack.c.h.b16 %v1623
    %v2013 = vunpack.c.l.b16 %v1624
    %v2014 = vpack.c.b16 %v1797, %v1790
    %v2015 = vpack.c.b16 %v1798, %v1791
    %v2016 = vpack.c.b16 %v1799, %v1792
    %v2017 = vpack.c.b16 %v1800, %v1793
    %v2018 = vpack.c.b16 %v1801, %v1794
    %v2019 = vpack.c.b16 %v1802, %v1795
    %v2020 = vpack.c.b16 %v1803, %v1796
    %v2021 = vpack.c.b16 %v1811, %v1804
    %v2022 = vpack.c.b16 %v1812, %v1805
    %v2023 = vpack.c.b16 %v1813, %v1806
    %v2024 = vpack.c.b16 %v1814, %v1807
    %v2025 = vpack.c.b16 %v1815, %v1808
    %v2026 = vpack.c.b16 %v1816, %v1809
    %v2027 = vpack.c.b16 %v1817, %v1810
    %v2028 = vpack.c.b16 %v1825, %v1818
    %v2029 = vpack.c.b16 %v1826, %v1819
    %v2030 = vpack.c.b16 %v1827, %v1820
    %v2031 = vpack.c.b16 %v1828, %v1821
    %v2032 = vpack.c.b16 %v1829, %v1822
    %v2033 = vpack.c.b16 %v1830, %v1823
    %v2034 = vpack.c.b16 %v1831, %v1824
    %v2035 = vpack.c.b16 %v1839, %v1832
    %v2036 = vpack.c.b16 %v1840, %v1833
    %v2037 = vpack.c.b16 %v1841, %v1834
    %v2038 = vpack.c.b16 %v1842, %v1835
    %v2039 = vpack.c.b16 %v1843, %v1836
    %v2040 = vpack.c.b16 %v1844, %v1837
    %v2041 = vpack.c.b16 %v1845, %v1838
    %v2042 = vpack.c.b16 %v1853, %v1846
    %v2043 = vpack.c.b16 %v1854, %v1847
    %v2044 = vpack.c.b16 %v1855, %v1848
    %v2045 = vpack.c.b16 %v1856, %v1849
    %v2046 = vpack.c.b16 %v1857, %v1850
    %v2047 = vpack.c.b16 %v1858, %v1851
    %v2048 = vpack.c.b16 %v1859, %v1852
    %v2049 = vpack.c.b16 %v1867, %v1860
    %v2050 = vpack.c.b16 %v1868, %v1861
    %v2051 = vpack.c.b16 %v1869, %v1862
    %v2052 = vpack.c.b16 %v1870, %v1863
    %v2053 = vpack.c.b16 %v1871, %v1864
    %v2054 = vpack.c.b16 %v1872, %v1865
    %v2055 = vpack.c.b16 %v1873, %v1866
    %v2056 = vpack.c.b16 %v1881, %v1874
    %v2057 = vpack.c.b16 %v1882, %v1875
    %v2058 = vpack.c.b16 %v1883, %v1876
    %v2059 = vpack.c.b16 %v1884, %v1877
    %v2060 = vpack.c.b16 %v1885, %v1878
    %v2061 = vpack.c.b16 %v1886, %v1879
    %v2062 = vpack.c.b16 %v1887, %v1880
    %v2063 = vpack.c.b16 %v1895, %v1888
    %v2064 = vpack.c.b16 %v1896, %v1889
    %v2065 = vpack.c.b16 %v1897, %v1890
    %v2066 = vpack.c.b16 %v1898, %v1891
    %v2067 = vpack.c.b16 %v1899, %v1892
    %v2068 = vpack.c.b16 %v1900, %v1893
    %v2069 = vpack.c.b16 %v1901, %v1894
    %v2070 = vpack.c.b16 %v1909, %v1902
    %v2071 = vpack.c.b16 %v1910, %v1903
    %v2072 = vpack.c.b16 %v1911, %v1904
    %v2073 = vpack.c.b16 %v1912, %v1905
    %v2074 = vpack.c.b16 %v1913, %v1906
    %v2075 = vpack.c.b16 %v1914, %v1907
    %v2076 = vpack.c.b16 %v1915, %v1908
    %v2077 = vpack.c.b16 %v1923, %v1916
    %v2078 = vpack.c.b16 %v1924, %v1917
    %v2079 = vpack.c.b16 %v1925, %v1918
    %v2080 = vpack.c.b16 %v1926, %v1919
    %v2081 = vpack.c.b16 %v1927, %v1920
    %v2082 = vpack.c.b16 %v1928, %v1921
    %v2083 = vpack.c.b16 %v1929, %v1922
    %v2084 = vpack.c.b16 %v1937, %v1930
    %v2085 = vpack.c.b16 %v1938, %v1931
    %v2086 = vpack.c.b16 %v1939, %v1932
    %v2087 = vpack.c.b16 %v1940, %v1933
    %v2088 = vpack.c.b16 %v1941, %v1934
    %v2089 = vpack.c.b16 %v1942, %v1935
    %v2090 = vpack.c.b16 %v1943, %v1936
    %v2091 = vpack.c.b16 %v1951, %v1944
    %v2092 = vpack.c.b16 %v1952, %v1945
    %v2093 = vpack.c.b16 %v1953, %v1946
    %v2094 = vpack.c.b16 %v1954, %v1947
    %v2095 = vpack.c.b16 %v1955, %v1948
    %v2096 = vpack.c.b16 %v1956, %v1949
    %v2097 = vpack.c.b16 %v1957, %v1950
    %v2098 = vpack.c.b16 %v1965, %v1958
    %v2099 = vpack.c.b16 %v1966, %v1959
    %v2100 = vpack.c.b16 %v1967, %v1960
    %v2101 = vpack.c.b16 %v1968, %v1961
    %v2102 = vpack.c.b16 %v1969, %v1962
    %v2103 = vpack.c.b16 %v1970, %v1963
    %v2104 = vpack.c.b16 %v1971, %v1964
    %v2105 = vpack.c.b16 %v1979, %v1972
    %v2106 = vpack.c.b16 %v1980, %v1973
    %v2107 = vpack.c.b16 %v1981, %v1974
    %v2108 = vpack.c.b16 %v1982, %v1975
    %v2109 = vpack.c.b16 %v1983, %v1976
    %v2110 = vpack.c.b16 %v1984, %v1977
    %v2111 = vpack.c.b16 %v1985, %v1978
    %v2112 = vpack.c.b16 %v1993, %v1986
    %v2113 = vpack.c.b16 %v1994, %v1987
    %v2114 = vpack.c.b16 %v1995, %v1988
    %v2115 = vpack.c.b16 %v1996, %v1989
    %v2116 = vpack.c.b16 %v1997, %v1990
    %v2117 = vpack.c.b16 %v1998, %v1991
    %v2118 = vpack.c.b16 %v1999, %v1992
    %v2119 = vpack.c.b16 %v2007, %v2000
    %v2120 = vpack.c.b16 %v2008, %v2001
    %v2121 = vpack.c.b16 %v2009, %v2002
    %v2122 = vpack.c.b16 %v2010, %v2003
    %v2123 = vpack.c.b16 %v2011, %v2004
    %v2124 = vpack.c.b16 %v2012, %v2005
    %v2125 = vpack.c.b16 %v2013, %v2006
    %2238 = vmatprep.subr.bf16.mxu0 %v2015
    %2239 = vmatpush1.bf16.msra.mxu0 %v2014
    %2240 = vmatprep.subr.bf16.mxu0 %v2022
    %2241 = vmatpush1.bf16.msra.mxu0 %v2021
    %2242 = vmatprep.subr.bf16.mxu0 %v2029
    %2243 = vmatpush1.bf16.msra.mxu0 %v2028
    %2244 = vmatprep.subr.bf16.mxu0 %v2036
    %2245 = vmatpush1.bf16.msra.mxu0 %v2035
    %2246 = vmatprep.subr.bf16.mxu0 %v2043
    %2247 = vmatpush1.bf16.msra.mxu0 %v2042
    %2248 = vmatprep.subr.bf16.mxu0 %v2050
    %2249 = vmatpush1.bf16.msra.mxu0 %v2049
    %2250 = vmatprep.subr.bf16.mxu0 %v2057
    %2251 = vmatpush1.bf16.msra.mxu0 %v2056
    %2252 = vmatprep.subr.bf16.mxu0 %v2064
    %2253 = vmatpush1.bf16.msra.mxu0 %v2063
    %2254 = vmatprep.subr.bf16.mxu0 %v2071
    %2255 = vmatpush1.bf16.msra.mxu0 %v2070
    %2256 = vmatprep.subr.bf16.mxu0 %v2078
    %2257 = vmatpush1.bf16.msra.mxu0 %v2077
    %2258 = vmatprep.subr.bf16.mxu0 %v2085
    %2259 = vmatpush1.bf16.msra.mxu0 %v2084
    %2260 = vmatprep.subr.bf16.mxu0 %v2092
    %2261 = vmatpush1.bf16.msra.mxu0 %v2091
    %2262 = vmatprep.subr.bf16.mxu0 %v2099
    %2263 = vmatpush1.bf16.msra.mxu0 %v2098
    %2264 = vmatprep.subr.bf16.mxu0 %v2106
    %2265 = vmatpush1.bf16.msra.mxu0 %v2105
    %2266 = vmatprep.subr.bf16.mxu0 %v2113
    %2267 = vmatpush1.bf16.msra.mxu0 %v2112
    %2268 = vmatprep.subr.bf16.mxu0 %v2120
    %2269 = vmatpush1.bf16.msra.mxu0 %v2119
    %2270 = vmatprep.mubr.bf16.mxu0 %v1496
    %2271 = vmatmul.mubr.bf16.gmra.mrb[0].mxu0 %v1495
    %v2272 = vpop.f32.mrb[0].mxu0
    %v2273 = vadd.f32 %v1630, %v2272
    %v2274 = vpop.f32.mrb[0].mxu0
    %v2275 = vadd.f32 %v1634, %v2274
    %v2276 = vpop.f32.mrb[0].mxu0
    %v2277 = vpop.f32.mrb[0].mxu0
    %2278 = vdwg.mxu0
    %2279 = vmatprep.subr.bf16.mxu0 %v2017
    %2280 = vmatpush1.bf16.msra.mxu0 %v2016
    %2281 = vmatprep.subr.bf16.mxu0 %v2024
    %2282 = vmatpush1.bf16.msra.mxu0 %v2023
    %2283 = vmatprep.subr.bf16.mxu0 %v2031
    %2284 = vmatpush1.bf16.msra.mxu0 %v2030
    %2285 = vmatprep.subr.bf16.mxu0 %v2038
    %2286 = vmatpush1.bf16.msra.mxu0 %v2037
    %2287 = vmatprep.subr.bf16.mxu0 %v2045
    %2288 = vmatpush1.bf16.msra.mxu0 %v2044
    %2289 = vmatprep.subr.bf16.mxu0 %v2052
    %2290 = vmatpush1.bf16.msra.mxu0 %v2051
    %2291 = vmatprep.subr.bf16.mxu0 %v2059
    %2292 = vmatpush1.bf16.msra.mxu0 %v2058
    %2293 = vmatprep.subr.bf16.mxu0 %v2066
    %2294 = vmatpush1.bf16.msra.mxu0 %v2065
    %2295 = vmatprep.subr.bf16.mxu0 %v2073
    %2296 = vmatpush1.bf16.msra.mxu0 %v2072
    %2297 = vmatprep.subr.bf16.mxu0 %v2080
    %2298 = vmatpush1.bf16.msra.mxu0 %v2079
    %2299 = vmatprep.subr.bf16.mxu0 %v2087
    %2300 = vmatpush1.bf16.msra.mxu0 %v2086
    %2301 = vmatprep.subr.bf16.mxu0 %v2094
    %2302 = vmatpush1.bf16.msra.mxu0 %v2093
    %2303 = vmatprep.subr.bf16.mxu0 %v2101
    %2304 = vmatpush1.bf16.msra.mxu0 %v2100
    %2305 = vmatprep.subr.bf16.mxu0 %v2108
    %2306 = vmatpush1.bf16.msra.mxu0 %v2107
    %2307 = vmatprep.subr.bf16.mxu0 %v2115
    %2308 = vmatpush1.bf16.msra.mxu0 %v2114
    %2309 = vmatprep.subr.bf16.mxu0 %v2122
    %2310 = vmatpush1.bf16.msra.mxu0 %v2121
    %2311 = vmatprep.mubr.bf16.mxu0 %v1496
    %2312 = vmatmul.mubr.bf16.gmra.mrb[0].mxu0 %v1495
    %v2313 = vpop.f32.mrb[0].mxu0
    %v2314 = vadd.f32 %v1638, %v2313
    %v2315 = vpop.f32.mrb[0].mxu0
    %v2316 = vadd.f32 %v1642, %v2315
    %v2317 = vpop.f32.mrb[0].mxu0
    %v2318 = vpop.f32.mrb[0].mxu0
    %2319 = vdwg.mxu0
    %2320 = vmatprep.subr.bf16.mxu0 %v2019
    %2321 = vmatpush1.bf16.msra.mxu0 %v2018
    %2322 = vmatprep.subr.bf16.mxu0 %v2026
    %2323 = vmatpush1.bf16.msra.mxu0 %v2025
    %2324 = vmatprep.subr.bf16.mxu0 %v2033
    %2325 = vmatpush1.bf16.msra.mxu0 %v2032
    %2326 = vmatprep.subr.bf16.mxu0 %v2040
    %2327 = vmatpush1.bf16.msra.mxu0 %v2039
    %2328 = vmatprep.subr.bf16.mxu0 %v2047
    %2329 = vmatpush1.bf16.msra.mxu0 %v2046
    %2330 = vmatprep.subr.bf16.mxu0 %v2054
    %2331 = vmatpush1.bf16.msra.mxu0 %v2053
    %2332 = vmatprep.subr.bf16.mxu0 %v2061
    %2333 = vmatpush1.bf16.msra.mxu0 %v2060
    %2334 = vmatprep.subr.bf16.mxu0 %v2068
    %2335 = vmatpush1.bf16.msra.mxu0 %v2067
    %2336 = vmatprep.subr.bf16.mxu0 %v2075
    %2337 = vmatpush1.bf16.msra.mxu0 %v2074
    %2338 = vmatprep.subr.bf16.mxu0 %v2082
    %2339 = vmatpush1.bf16.msra.mxu0 %v2081
    %2340 = vmatprep.subr.bf16.mxu0 %v2089
    %2341 = vmatpush1.bf16.msra.mxu0 %v2088
    %2342 = vmatprep.subr.bf16.mxu0 %v2096
    %2343 = vmatpush1.bf16.msra.mxu0 %v2095
    %2344 = vmatprep.subr.bf16.mxu0 %v2103
    %2345 = vmatpush1.bf16.msra.mxu0 %v2102
    %2346 = vmatprep.subr.bf16.mxu0 %v2110
    %2347 = vmatpush1.bf16.msra.mxu0 %v2109
    %2348 = vmatprep.subr.bf16.mxu0 %v2117
    %2349 = vmatpush1.bf16.msra.mxu0 %v2116
    %2350 = vmatprep.subr.bf16.mxu0 %v2124
    %2351 = vmatpush1.bf16.msra.mxu0 %v2123
    %2352 = vmatprep.mubr.bf16.mxu0 %v1496
    %2353 = vmatmul.mubr.bf16.gmra.mrb[0].mxu0 %v1495
    %v2354 = vpop.f32.mrb[0].mxu0
    %v2355 = vadd.f32 %v1646, %v2354
    %v2356 = vpop.f32.mrb[0].mxu0
    %v2357 = vadd.f32 %v1650, %v2356
    %v2358 = vpop.f32.mrb[0].mxu0
    %v2359 = vpop.f32.mrb[0].mxu0
    %2360 = vdwg.mxu0
    %2361 = vmatprep.subr.bf16.mxu0 0
    %2362 = vmatpush1.bf16.msra.mxu0 %v2020
    %2363 = vmatprep.subr.bf16.mxu0 0
    %2364 = vmatpush1.bf16.msra.mxu0 %v2027
    %2365 = vmatprep.subr.bf16.mxu0 0
    %2366 = vmatpush1.bf16.msra.mxu0 %v2034
    %2367 = vmatprep.subr.bf16.mxu0 0
    %2368 = vmatpush1.bf16.msra.mxu0 %v2041
    %2369 = vmatprep.subr.bf16.mxu0 0
    %2370 = vmatpush1.bf16.msra.mxu0 %v2048
    %2371 = vmatprep.subr.bf16.mxu0 0
    %2372 = vmatpush1.bf16.msra.mxu0 %v2055
    %2373 = vmatprep.subr.bf16.mxu0 0
    %2374 = vmatpush1.bf16.msra.mxu0 %v2062
    %2375 = vmatprep.subr.bf16.mxu0 0
    %2376 = vmatpush1.bf16.msra.mxu0 %v2069
    %2377 = vmatprep.subr.bf16.mxu0 0
    %2378 = vmatpush1.bf16.msra.mxu0 %v2076
    %2379 = vmatprep.subr.bf16.mxu0 0
    %2380 = vmatpush1.bf16.msra.mxu0 %v2083
    %2381 = vmatprep.subr.bf16.mxu0 0
    %2382 = vmatpush1.bf16.msra.mxu0 %v2090
    %2383 = vmatprep.subr.bf16.mxu0 0
    %2384 = vmatpush1.bf16.msra.mxu0 %v2097
    %2385 = vmatprep.subr.bf16.mxu0 0
    %2386 = vmatpush1.bf16.msra.mxu0 %v2104
    %2387 = vmatprep.subr.bf16.mxu0 0
    %2388 = vmatpush1.bf16.msra.mxu0 %v2111
    %2389 = vmatprep.subr.bf16.mxu0 0
    %2390 = vmatpush1.bf16.msra.mxu0 %v2118
    %2391 = vmatprep.subr.bf16.mxu0 0
    %2392 = vmatpush1.bf16.msra.mxu0 %v2125
    %2393 = vmatprep.mubr.bf16.mxu0 %v1496
    %2394 = vmatmul.mubr.bf16.gmra.mrb[0].mxu0 %v1495
    %v2395 = vpop.f32.mrb[0].mxu0
    %v2396 = vadd.f32 %v1654, %v2395
    %v2397 = vpop.f32.mrb[0].mxu0
    %v2398 = vpop.f32.mrb[0].mxu0
    %v2399 = vpop.f32.mrb[0].mxu0
    %2400 = vdwg.mxu0
    %v2401 = vxor.u32 %v2273, 2147483648
    %v2402 = vxor.u32 %v2275, 2147483648
    %v2403 = vxor.u32 %v2314, 2147483648
    %v2404 = vxor.u32 %v2316, 2147483648
    %v2405 = vxor.u32 %v2355, 2147483648
    %v2406 = vxor.u32 %v2357, 2147483648
    %v2407 = vxor.u32 %v2396, 2147483648
    %v2408 = vmul.f32 %v2401, 1.442695
    %v2409 = vpow.pop %v2408
    %v2410 = vmul.f32 %v2402, 1.442695
    %v2411 = vpow.pop %v2410
    %v2412 = vmul.f32 %v2403, 1.442695
    %v2413 = vpow.pop %v2412
    %v2414 = vmul.f32 %v2404, 1.442695
    %v2415 = vpow.pop %v2414
    %v2416 = vmul.f32 %v2405, 1.442695
    %v2417 = vpow.pop %v2416
    %v2418 = vmul.f32 %v2406, 1.442695
    %v2419 = vpow.pop %v2418
    %v2420 = vmul.f32 %v2407, 1.442695
    %v2421 = vpow.pop %v2420
    %v2422 = vadd.f32 %v2409, 1.0
    %v2423 = vadd.f32 %v2411, 1.0
    %v2424 = vadd.f32 %v2413, 1.0
    %v2425 = vadd.f32 %v2415, 1.0
    %v2426 = vadd.f32 %v2417, 1.0
    %v2427 = vadd.f32 %v2419, 1.0
    %v2428 = vadd.f32 %v2421, 1.0
    %v2429 = vrcp.pop %v2422
    %v2430 = vmul.f32 1.0, %v2429
    %v2431 = vrcp.pop %v2423
    %v2432 = vmul.f32 1.0, %v2431
    %v2433 = vrcp.pop %v2424
    %v2434 = vmul.f32 1.0, %v2433
    %v2435 = vrcp.pop %v2425
    %v2436 = vmul.f32 1.0, %v2435
    %v2437 = vrcp.pop %v2426
    %v2438 = vmul.f32 1.0, %v2437
    %v2439 = vrcp.pop %v2427
    %v2440 = vmul.f32 1.0, %v2439
    %v2441 = vrcp.pop %v2428
    %v2442 = vmul.f32 1.0, %v2441
    %v2443 = vpack.c.bf16 %v2430, %v2430
    %v2444 = vpack.c.bf16 %v2432, %v2432
    %v2445 = vpack.c.bf16 %v2434, %v2434
    %v2446 = vpack.c.bf16 %v2436, %v2436
    %v2447 = vpack.c.bf16 %v2438, %v2438
    %v2448 = vpack.c.bf16 %v2440, %v2440
    %v2449 = vpack.c.bf16 %v2442, %v2442
    %v2457 = vcombine.low %v2443, %v2444
    %v2458 = vcombine.low %v2445, %v2446
    %v2459 = vcombine.low %v2447, %v2448
    %v2461 = vunpack.c.l.s4 1966171168
    %v2462 = vunpack.c.0.s8 %v2461
    %v2463 = vlaneseq
    %v2464 = vshrl.u32 %v2463, 7
    %v2465 = vsub.s32 %v2462, %v2464
    %v2466 = vrot.slane %v2457, %v2465
    %v2468 = vunpack.c.l.s4 1966171168
    %v2469 = vunpack.c.0.s8 %v2468
    %v2470 = vlaneseq
    %v2471 = vshrl.u32 %v2470, 7
    %v2472 = vsub.s32 %v2469, %v2471
    %v2473 = vrot.slane %v2458, %v2472
    %v2475 = vunpack.c.l.s4 1966171168
    %v2476 = vunpack.c.0.s8 %v2475
    %v2477 = vlaneseq
    %v2478 = vshrl.u32 %v2477, 7
    %v2479 = vsub.s32 %v2476, %v2478
    %v2480 = vrot.slane %v2459, %v2479
    %v2482 = vunpack.c.l.s4 1966171168
    %v2483 = vunpack.c.0.s8 %v2482
    %v2484 = vlaneseq
    %v2485 = vshrl.u32 %v2484, 7
    %v2486 = vsub.s32 %v2483, %v2485
    %v2487 = vrot.slane %v2449, %v2486
    %v2488 = vcombine.low %v2466, %v2473
    %v2489 = vcombine.low %v2480, %v2487
    %v2491 = vunpack.c.l.s4 1966171168
    %v2492 = vunpack.c.0.s8 %v2491
    %v2493 = vlaneseq
    %v2494 = vshrl.u32 %v2493, 7
    %v2495 = vsub.s32 %v2492, %v2494
    %v2496 = vrot.slane %v2488, %v2495
    %v2498 = vunpack.c.l.s4 1966171168
    %v2499 = vunpack.c.0.s8 %v2498
    %v2500 = vlaneseq
    %v2501 = vshrl.u32 %v2500, 7
    %v2502 = vsub.s32 %v2499, %v2501
    %v2503 = vrot.slane %v2489, %v2502
    %v2504 = vcombine.low %v2496, %v2503
    %2506 = vst [vmem:[%s14] sm:$0x7f] %v2504
    %v2507 = vmul.f32 %v1270, %v1270
    %v2508 = vmul.f32 %v1269, %v1269
    %v2509 = vadd.f32 %v2508, %v2507
    %v2510 = vadd.f32 %v2507, 1e-08
    %v2511 = vlog2.pop %v2510
    %v2512 = vmul.f32 %v2511, 0.6931472
    %v2513 = vsub.f32 %v2509, %v2512
    %v2514 = vsub.f32 %v2513, 1.0
    %v2515 = vlaneseq
    %v2516 = vand.u32 %v2515, 127
    %vm2517 = vcmp.lt.s32.totalorder %v2516, 10
    %v2518 = vsel %vm2517, %v2514, 0.0
    %vm2519 = vcmask 1041408
    %v2520 = vsel %vm2519, %v2518, 0.0
    %2521 = vadd.xlane.f32.xlu0 %v2520
    %v2522 = vpop.xlane.xlu0 %2521
    %vm2523 = vcmask 1024
    %2524 = vst.msk [vmem:[%s15] sm:$0x3] %vm2523, %v2522
    // Predicated region
    $region66: #{vae_forward.1} parent=1 // pred_check
      _
    $region67: #{vae_forward.1} parent=1 // pred_check_branch
      %2526 = sbr.rel (0) target = $region69
    $region68: #{vae_forward.1} parent=1 // pred_region
      _
    $region69: #{vae_forward.1} parent=1 // pred_fallthru
      _
    // Predicated region
    $region70: #{vae_forward.1} parent=1 // pred_check
      _
    $region71: #{vae_forward.1} parent=1 // pred_check_branch
      %2528 = sbr.rel (0) target = $region73
    $region72: #{vae_forward.1} parent=1 // pred_region
      _
    $region73: #{vae_forward.1} parent=1 // pred_fallthru
      _
    // Predicated region
    $region74: #{vae_forward.1} parent=1 // pred_check
      _
    $region75: #{vae_forward.1} parent=1 // pred_check_branch
      %2530 = sbr.rel (0) target = $region77
    $region76: #{vae_forward.1} parent=1 // pred_region
      _
    $region77: #{vae_forward.1} parent=1 // pred_fallthru
      _
    // Predicated region
    $region78: #{vae_forward.1} parent=1 // pred_check
      _
    $region79: #{vae_forward.1} parent=1 // pred_check_branch
      %2532 = sbr.rel (0) target = $region81
    $region80: #{vae_forward.1} parent=1 // pred_region
      _
    $region81: #{vae_forward.1} parent=1 // pred_fallthru
      _
    %2533 = vsyncpa [#allocation3], 1
    %2534 = vsyncpa [#allocation5], 1

</llo_original>
